<compile_context>
chip_gen: v5e
topology: v5e:2x2
jax: 0.10.0
libtpu: 0.0.40
codegen_flags: <defaults>
</compile_context>

<pallas_src>
import jax
import jax.numpy as jnp
from jax import lax
from jax.experimental import pallas as pl
from jax.experimental.pallas import tpu as pltpu


# ----------------------------- fused kernel --------------------------------------

def _relu(x):
    return jnp.maximum(x, 0.0)


def fused_forward_kernel(
        xf_ref,                                        # (S*Bp, D), time-major: row = t*Bp + b
        fe_w1_ref, fe_b1_ref, fe_w2_ref, fe_b2_ref,    # feature extractor
        wih_ref, whh_ref, b_ref,                       # (H,4H), (H,4H), (1,4H)  [i,f,g,o]
        hw1_ref, hb1_ref, hw2_ref, hb2_ref,            # packed heads
        out_ref):                                      # (Bp, W_pad) packed [heads | h | c | 0]
    Bp = out_ref.shape[0]
    H = whh_ref.shape[0]
    SB = xf_ref.shape[0]
    S = SB // Bp

    # --- 1) feature extractor for all (t, b) rows in two MXU matmuls -------------
    z = _relu(jnp.dot(xf_ref[...], fe_w1_ref[...],
                      preferred_element_type=jnp.float32) + fe_b1_ref[...])
    feats = _relu(jnp.dot(z, fe_w2_ref[...],
                          preferred_element_type=jnp.float32) + fe_b2_ref[...])   # (S*Bp, H)

    # --- 2) hoisted input-gate contribution (bias folded in) ---------------------
    xg_all = jnp.dot(feats, wih_ref[...],
                     preferred_element_type=jnp.float32) + b_ref[...]             # (S*Bp, 4H)

    # --- 3) LSTM: statically unrolled time loop, 1 fused matmul per step ---------
    whh = whh_ref[...]                                                             # (H, 4H)
    h = jnp.zeros((Bp, H), jnp.float32)
    c = jnp.zeros((Bp, H), jnp.float32)
    for t in range(S):
        xg_t = xg_all[t * Bp:(t + 1) * Bp, :]                                      # aligned (Bp, 4H)
        g = jnp.dot(h, whh, preferred_element_type=jnp.float32) + xg_t             # (Bp, 4H)
        sg = jax.nn.sigmoid(g)
        tg = jnp.tanh(g)
        i_g = sg[:, 0:H]            # PyTorch gate order [i, f, g, o]
        f_g = sg[:, H:2 * H]
        g_g = tg[:, 2 * H:3 * H]
        o_g = sg[:, 3 * H:4 * H]
        c = f_g * c + i_g * g_g
        h = o_g * jnp.tanh(c)

    # --- 4) heads: shared first-layer matmul + block-diagonal second layer -------
    zh = _relu(jnp.dot(h, hw1_ref[...],
                       preferred_element_type=jnp.float32) + hb1_ref[...])         # (Bp, 3*128)
    out = jnp.dot(zh, hw2_ref[...],
                  preferred_element_type=jnp.float32) + hb2_ref[...]               # (Bp, 2*od+1)

    od = (out.shape[-1] - 1) // 2
    col = lax.broadcasted_iota(jnp.int32, out.shape, 1)
    is_std = jnp.logical_and(col >= od, col < 2 * od)
    # torch Softplus (beta=1, threshold=20), then +1e-6 (std columns only)
    sp = jnp.where(out > 20.0, out,
                   jnp.log1p(jnp.exp(jnp.minimum(out, 20.0)))) + 1e-6
    heads = jnp.where(is_std, sp, out)

    # --- 5) single lane-dense packed store: [heads | h | c | zero pad] -----------
    used = heads.shape[1] + 2 * H
    pad = out_ref.shape[1] - used
    pieces = [heads, h, c]
    if pad > 0:
        pieces.append(jnp.zeros((Bp, pad), jnp.float32))
    out_ref[...] = jnp.concatenate(pieces, axis=1)


# ----------------------------- wrapper --------------------------------------------

def enhanced_pid_forward(x, kp):
    """x: (batch, seq, input_dim) float32.  hidden_state=None path of the PyTorch forward."""
    # TODO(synk): the optional external `hidden_state=(h0, c0)` argument is not plumbed;
    # only the hidden_state=None (zero-init) path of the PyTorch forward is implemented.
    B, S, D = x.shape
    H = kp["whh"].shape[0]
    od = (kp["hb2"].shape[-1] - 1) // 2
    hw = 2 * od + 1

    # pad batch to a full sublane tile so per-step slices are aligned whole vregs
    Bp = ((B + 7) // 8) * 8
    if Bp != B:
        x = jnp.concatenate([x, jnp.zeros((Bp - B, S, D), x.dtype)], axis=0)
    # time-major rows: row index = t*Bp + b  -> contiguous static slice per timestep
    x_tm = x.transpose(1, 0, 2).reshape(S * Bp, D)

    w_pad = ((hw + 2 * H + 127) // 128) * 128

    vmem = pl.BlockSpec(memory_space=pltpu.MemorySpace.VMEM)
    packed = pl.pallas_call(
        fused_forward_kernel,
        out_shape=jax.ShapeDtypeStruct((Bp, w_pad), jnp.float32),
        in_specs=[vmem] * 12,
        out_specs=vmem,
    )(x_tm,
      kp["fe_w1"], kp["fe_b1"], kp["fe_w2"], kp["fe_b2"],
      kp["wih"], kp["whh"], kp["b"],
      kp["hw1"], kp["hb1"], kp["hw2"], kp["hb2"])

    heads = packed[:B, :hw]
    h_n = packed[:B, hw:hw + H]
    c_n = packed[:B, hw + H:hw + 2 * H]
    pid_mean = heads[:, :od]
    pid_std = heads[:, od:2 * od]
    value = heads[:, 2 * od:hw]
    # For a 1-layer LSTM, lstm_out[:, -1, :] == h_n; return (1, B, H) like torch.
    return pid_mean, pid_std, value, (h_n[None], c_n[None])


# ----------------------------- params, packing & reference ------------------------

def init_params(key, input_dim, H, output_dim):
    def lin(k, fan_in, fan_out):
        k1, k2 = jax.random.split(k)
        bound = 1.0 / float(fan_in) ** 0.5
        w = jax.random.uniform(k1, (fan_in, fan_out), jnp.float32, -bound, bound)
        b = jax.random.uniform(k2, (1, fan_out), jnp.float32, -bound, bound)
        return w, b

    keys = jax.random.split(key, 12)
    p = {}
    p["fe_w1"], p["fe_b1"] = lin(keys[0], input_dim, 256)
    p["fe_w2"], p["fe_b2"] = lin(keys[1], 256, H)
    bound = 1.0 / float(H) ** 0.5
    p["lstm_wih"] = jax.random.uniform(keys[2], (H, 4 * H), jnp.float32, -bound, bound)
    p["lstm_whh"] = jax.random.uniform(keys[3], (H, 4 * H), jnp.float32, -bound, bound)
    b_ih = jax.random.uniform(keys[4], (1, 4 * H), jnp.float32, -bound, bound)
    b_hh = jax.random.uniform(keys[5], (1, 4 * H), jnp.float32, -bound, bound)
    p["lstm_b"] = b_ih + b_hh
    p["m_w1"], p["m_b1"] = lin(keys[6], H, 128)
    p["m_w2"], p["m_b2"] = lin(keys[7], 128, output_dim)
    p["s_w1"], p["s_b1"] = lin(keys[8], H, 128)
    p["s_w2"], p["s_b2"] = lin(keys[9], 128, output_dim)
    p["v_w1"], p["v_b1"] = lin(keys[10], H, 128)
    p["v_w2"], p["v_b2"] = lin(keys[11], 128, 1)
    return p


def pack_params(p):
    """One-time repack of the canonical params into the fused-kernel layout."""
    od = p["m_w2"].shape[1]
    hh = p["m_w1"].shape[1]                      # 128

    hw2 = jnp.zeros((3 * hh, 2 * od + 1), jnp.float32)
    hw2 = hw2.at[0:hh, 0:od].set(p["m_w2"])
    hw2 = hw2.at[hh:2 * hh, od:2 * od].set(p["s_w2"])
    hw2 = hw2.at[2 * hh:3 * hh, 2 * od:2 * od + 1].set(p["v_w2"])

    return {
        "fe_w1": p["fe_w1"], "fe_b1": p["fe_b1"],
        "fe_w2": p["fe_w2"], "fe_b2": p["fe_b2"],
        # LSTM weights stay in their native packed layout, gate order [i, f, g, o]
        "wih": p["lstm_wih"],                    # (H, 4H)
        "whh": p["lstm_whh"],                    # (H, 4H)
        "b": p["lstm_b"],                        # (1, 4H) = b_ih + b_hh
        # packed heads
        "hw1": jnp.concatenate([p["m_w1"], p["s_w1"], p["v_w1"]], axis=1),   # (H, 3*128)
        "hb1": jnp.concatenate([p["m_b1"], p["s_b1"], p["v_b1"]], axis=1),   # (1, 3*128)
        "hw2": hw2,                                                          # (3*128, 2*od+1)
        "hb2": jnp.concatenate([p["m_b2"], p["s_b2"], p["v_b2"]], axis=1),   # (1, 2*od+1)
    }


def reference_forward(x, params):
    B, S, D = x.shape
    x_flat = x.reshape(B * S, D)
    z = jnp.maximum(x_flat @ params["fe_w1"] + params["fe_b1"], 0.0)
    feats = jnp.maximum(z @ params["fe_w2"] + params["fe_b2"], 0.0)
    H = feats.shape[-1]
    feats = feats.reshape(B, S, H)
    h = jnp.zeros((B, H), jnp.float32)
    c = jnp.zeros((B, H), jnp.float32)
    for t in range(S):
        g = feats[:, t] @ params["lstm_wih"] + h @ params["lstm_whh"] + params["lstm_b"]
        i = jax.nn.sigmoid(g[:, :H])
        f = jax.nn.sigmoid(g[:, H:2 * H])
        gg = jnp.tanh(g[:, 2 * H:3 * H])
        o = jax.nn.sigmoid(g[:, 3 * H:])
        c = f * c + i * gg
        h = o * jnp.tanh(c)

    def mlp(w1, b1, w2, b2):
        return jnp.maximum(h @ w1 + b1, 0.0) @ w2 + b2

    mean = mlp(params["m_w1"], params["m_b1"], params["m_w2"], params["m_b2"])
    std = jax.nn.softplus(mlp(params["s_w1"], params["s_b1"], params["s_w2"], params["s_b2"])) + 1e-6
    value = mlp(params["v_w1"], params["v_b1"], params["v_w2"], params["v_b2"])
    return mean, std, value, (h[None], c[None])


# ----------------------------- main ------------------------------------------------

if __name__ == "__main__":
    batch, seq, input_dim, hidden, output_dim = 2, 8, 16, 32, 4

    key = jax.random.PRNGKey(0)
    k_x, k_p = jax.random.split(key)
    x = jax.random.normal(k_x, (batch, seq, input_dim), jnp.float32)
    params = init_params(k_p, input_dim, hidden, output_dim)
    kparams = pack_params(params)            # one-time repack into kernel layout

    pid_mean, pid_std, value, (h_n, c_n) = enhanced_pid_forward(x, kparams)
    jax.block_until_ready((pid_mean, pid_std, value, h_n, c_n))

    # correctness check vs. pure-JAX reference
    r_mean, r_std, r_value, (r_h, r_c) = reference_forward(x, params)
    assert pid_mean.shape == (batch, output_dim)
    assert pid_std.shape == (batch, output_dim)
    assert value.shape == (batch, 1)
    assert h_n.shape == (1, batch, hidden) and c_n.shape == (1, batch, hidden)
    for a, b in ((pid_mean, r_mean), (pid_std, r_std), (value, r_value), (h_n, r_h), (c_n, r_c)):
        assert jnp.allclose(a, b, atol=1e-4, rtol=1e-4), (a, b)

    print("KERNEL_OK")
</pallas_src>

<mosaic_0001>
module attributes {stable_mosaic.version = 11 : i64} {
  func.func @fused_forward_kernel(%arg0: memref<64x16xf32, #tpu.memory_space<vmem>>, %arg1: memref<16x256xf32, #tpu.memory_space<vmem>>, %arg2: memref<1x256xf32, #tpu.memory_space<vmem>>, %arg3: memref<256x32xf32, #tpu.memory_space<vmem>>, %arg4: memref<1x32xf32, #tpu.memory_space<vmem>>, %arg5: memref<32x128xf32, #tpu.memory_space<vmem>>, %arg6: memref<32x128xf32, #tpu.memory_space<vmem>>, %arg7: memref<1x128xf32, #tpu.memory_space<vmem>>, %arg8: memref<32x384xf32, #tpu.memory_space<vmem>>, %arg9: memref<1x384xf32, #tpu.memory_space<vmem>>, %arg10: memref<384x9xf32, #tpu.memory_space<vmem>>, %arg11: memref<1x9xf32, #tpu.memory_space<vmem>>, %arg12: memref<8x128xf32, #tpu.memory_space<vmem>>) attributes {dimension_semantics = [], scalar_prefetch = 0 : i64, scratch_operands = 0 : i64, tpu.core_type = #tpu.core_type<tc>} {
    %c0 = arith.constant 0 : index
    %c0_0 = arith.constant 0 : index
    %0 = vector.load %arg0[%c0, %c0_0] : memref<64x16xf32, #tpu.memory_space<vmem>>, vector<64x16xf32>
    %c0_1 = arith.constant 0 : index
    %c0_2 = arith.constant 0 : index
    %1 = vector.load %arg1[%c0_1, %c0_2] : memref<16x256xf32, #tpu.memory_space<vmem>>, vector<16x256xf32>
    %cst = arith.constant dense<0.000000e+00> : vector<64x256xf32>
    %2 = tpu.matmul %0, %1, %cst {dimension_numbers = #tpu.dot_dimension_numbers<[1], [0], [0], [1], [0, 0, 1, 1], [], []>} : vector<64x16xf32>, vector<16x256xf32>, vector<64x256xf32> -> vector<64x256xf32>
    %c0_3 = arith.constant 0 : index
    %c0_4 = arith.constant 0 : index
    %3 = vector.load %arg2[%c0_3, %c0_4] : memref<1x256xf32, #tpu.memory_space<vmem>>, vector<1x256xf32>
    %4 = vector.broadcast %3 : vector<1x256xf32> to vector<64x256xf32>
    %5 = arith.addf %2, %4 : vector<64x256xf32>
    %cst_5 = arith.constant 0.000000e+00 : f32
    %6 = vector.broadcast %cst_5 : f32 to vector<64x256xf32>
    %7 = arith.maximumf %5, %6 : vector<64x256xf32>
    %c0_6 = arith.constant 0 : index
    %c0_7 = arith.constant 0 : index
    %8 = vector.load %arg3[%c0_6, %c0_7] : memref<256x32xf32, #tpu.memory_space<vmem>>, vector<256x32xf32>
    %cst_8 = arith.constant dense<0.000000e+00> : vector<64x32xf32>
    %9 = tpu.matmul %7, %8, %cst_8 {dimension_numbers = #tpu.dot_dimension_numbers<[1], [0], [0], [1], [0, 0, 1, 1], [], []>} : vector<64x256xf32>, vector<256x32xf32>, vector<64x32xf32> -> vector<64x32xf32>
    %c0_9 = arith.constant 0 : index
    %c0_10 = arith.constant 0 : index
    %10 = vector.load %arg4[%c0_9, %c0_10] : memref<1x32xf32, #tpu.memory_space<vmem>>, vector<1x32xf32>
    %11 = vector.broadcast %10 : vector<1x32xf32> to vector<64x32xf32>
    %12 = arith.addf %9, %11 : vector<64x32xf32>
    %cst_11 = arith.constant 0.000000e+00 : f32
    %13 = vector.broadcast %cst_11 : f32 to vector<64x32xf32>
    %14 = arith.maximumf %12, %13 : vector<64x32xf32>
    %c0_12 = arith.constant 0 : index
    %c0_13 = arith.constant 0 : index
    %15 = vector.load %arg5[%c0_12, %c0_13] : memref<32x128xf32, #tpu.memory_space<vmem>>, vector<32x128xf32>
    %cst_14 = arith.constant dense<0.000000e+00> : vector<64x128xf32>
    %16 = tpu.matmul %14, %15, %cst_14 {dimension_numbers = #tpu.dot_dimension_numbers<[1], [0], [0], [1], [0, 0, 1, 1], [], []>} : vector<64x32xf32>, vector<32x128xf32>, vector<64x128xf32> -> vector<64x128xf32>
    %c0_15 = arith.constant 0 : index
    %c0_16 = arith.constant 0 : index
    %17 = vector.load %arg7[%c0_15, %c0_16] : memref<1x128xf32, #tpu.memory_space<vmem>>, vector<1x128xf32>
    %18 = vector.broadcast %17 : vector<1x128xf32> to vector<64x128xf32>
    %19 = arith.addf %16, %18 : vector<64x128xf32>
    %c0_17 = arith.constant 0 : index
    %c0_18 = arith.constant 0 : index
    %20 = vector.load %arg6[%c0_17, %c0_18] : memref<32x128xf32, #tpu.memory_space<vmem>>, vector<32x128xf32>
    %cst_19 = arith.constant 0.000000e+00 : f32
    %21 = vector.broadcast %cst_19 : f32 to vector<8x32xf32>
    %cst_20 = arith.constant 0.000000e+00 : f32
    %22 = vector.broadcast %cst_20 : f32 to vector<8x32xf32>
    %23 = vector.extract_strided_slice %19 {offsets = [0, 0], sizes = [8, 128], strides = [1, 1]} : vector<64x128xf32> to vector<8x128xf32>
    %cst_21 = arith.constant dense<0.000000e+00> : vector<8x128xf32>
    %24 = tpu.matmul %21, %20, %cst_21 {dimension_numbers = #tpu.dot_dimension_numbers<[1], [0], [0], [1], [0, 0, 1, 1], [], []>} : vector<8x32xf32>, vector<32x128xf32>, vector<8x128xf32> -> vector<8x128xf32>
    %25 = arith.addf %24, %23 : vector<8x128xf32>
    %26 = arith.negf %25 : vector<8x128xf32>
    %27 = math.exp %26 : vector<8x128xf32>
    %cst_22 = arith.constant 1.000000e+00 : f32
    %28 = vector.broadcast %cst_22 : f32 to vector<8x128xf32>
    %29 = arith.addf %28, %27 : vector<8x128xf32>
    %30 = arith.divf %28, %29 : vector<8x128xf32>
    %31 = math.tanh %25 : vector<8x128xf32>
    %32 = vector.extract_strided_slice %30 {offsets = [0, 0], sizes = [8, 32], strides = [1, 1]} : vector<8x128xf32> to vector<8x32xf32>
    %33 = vector.extract_strided_slice %30 {offsets = [0, 32], sizes = [8, 32], strides = [1, 1]} : vector<8x128xf32> to vector<8x32xf32>
    %34 = vector.extract_strided_slice %31 {offsets = [0, 64], sizes = [8, 32], strides = [1, 1]} : vector<8x128xf32> to vector<8x32xf32>
    %35 = vector.extract_strided_slice %30 {offsets = [0, 96], sizes = [8, 32], strides = [1, 1]} : vector<8x128xf32> to vector<8x32xf32>
    %36 = arith.mulf %33, %22 : vector<8x32xf32>
    %37 = arith.mulf %32, %34 : vector<8x32xf32>
    %38 = arith.addf %36, %37 : vector<8x32xf32>
    %39 = math.tanh %38 : vector<8x32xf32>
    %40 = arith.mulf %35, %39 : vector<8x32xf32>
    %41 = vector.extract_strided_slice %19 {offsets = [8, 0], sizes = [8, 128], strides = [1, 1]} : vector<64x128xf32> to vector<8x128xf32>
    %cst_23 = arith.constant dense<0.000000e+00> : vector<8x128xf32>
    %42 = tpu.matmul %40, %20, %cst_23 {dimension_numbers = #tpu.dot_dimension_numbers<[1], [0], [0], [1], [0, 0, 1, 1], [], []>} : vector<8x32xf32>, vector<32x128xf32>, vector<8x128xf32> -> vector<8x128xf32>
    %43 = arith.addf %42, %41 : vector<8x128xf32>
    %44 = arith.negf %43 : vector<8x128xf32>
    %45 = math.exp %44 : vector<8x128xf32>
    %cst_24 = arith.constant 1.000000e+00 : f32
    %46 = vector.broadcast %cst_24 : f32 to vector<8x128xf32>
    %47 = arith.addf %46, %45 : vector<8x128xf32>
    %48 = arith.divf %46, %47 : vector<8x128xf32>
    %49 = math.tanh %43 : vector<8x128xf32>
    %50 = vector.extract_strided_slice %48 {offsets = [0, 0], sizes = [8, 32], strides = [1, 1]} : vector<8x128xf32> to vector<8x32xf32>
    %51 = vector.extract_strided_slice %48 {offsets = [0, 32], sizes = [8, 32], strides = [1, 1]} : vector<8x128xf32> to vector<8x32xf32>
    %52 = vector.extract_strided_slice %49 {offsets = [0, 64], sizes = [8, 32], strides = [1, 1]} : vector<8x128xf32> to vector<8x32xf32>
    %53 = vector.extract_strided_slice %48 {offsets = [0, 96], sizes = [8, 32], strides = [1, 1]} : vector<8x128xf32> to vector<8x32xf32>
    %54 = arith.mulf %51, %38 : vector<8x32xf32>
    %55 = arith.mulf %50, %52 : vector<8x32xf32>
    %56 = arith.addf %54, %55 : vector<8x32xf32>
    %57 = math.tanh %56 : vector<8x32xf32>
    %58 = arith.mulf %53, %57 : vector<8x32xf32>
    %59 = vector.extract_strided_slice %19 {offsets = [16, 0], sizes = [8, 128], strides = [1, 1]} : vector<64x128xf32> to vector<8x128xf32>
    %cst_25 = arith.constant dense<0.000000e+00> : vector<8x128xf32>
    %60 = tpu.matmul %58, %20, %cst_25 {dimension_numbers = #tpu.dot_dimension_numbers<[1], [0], [0], [1], [0, 0, 1, 1], [], []>} : vector<8x32xf32>, vector<32x128xf32>, vector<8x128xf32> -> vector<8x128xf32>
    %61 = arith.addf %60, %59 : vector<8x128xf32>
    %62 = arith.negf %61 : vector<8x128xf32>
    %63 = math.exp %62 : vector<8x128xf32>
    %cst_26 = arith.constant 1.000000e+00 : f32
    %64 = vector.broadcast %cst_26 : f32 to vector<8x128xf32>
    %65 = arith.addf %64, %63 : vector<8x128xf32>
    %66 = arith.divf %64, %65 : vector<8x128xf32>
    %67 = math.tanh %61 : vector<8x128xf32>
    %68 = vector.extract_strided_slice %66 {offsets = [0, 0], sizes = [8, 32], strides = [1, 1]} : vector<8x128xf32> to vector<8x32xf32>
    %69 = vector.extract_strided_slice %66 {offsets = [0, 32], sizes = [8, 32], strides = [1, 1]} : vector<8x128xf32> to vector<8x32xf32>
    %70 = vector.extract_strided_slice %67 {offsets = [0, 64], sizes = [8, 32], strides = [1, 1]} : vector<8x128xf32> to vector<8x32xf32>
    %71 = vector.extract_strided_slice %66 {offsets = [0, 96], sizes = [8, 32], strides = [1, 1]} : vector<8x128xf32> to vector<8x32xf32>
    %72 = arith.mulf %69, %56 : vector<8x32xf32>
    %73 = arith.mulf %68, %70 : vector<8x32xf32>
    %74 = arith.addf %72, %73 : vector<8x32xf32>
    %75 = math.tanh %74 : vector<8x32xf32>
    %76 = arith.mulf %71, %75 : vector<8x32xf32>
    %77 = vector.extract_strided_slice %19 {offsets = [24, 0], sizes = [8, 128], strides = [1, 1]} : vector<64x128xf32> to vector<8x128xf32>
    %cst_27 = arith.constant dense<0.000000e+00> : vector<8x128xf32>
    %78 = tpu.matmul %76, %20, %cst_27 {dimension_numbers = #tpu.dot_dimension_numbers<[1], [0], [0], [1], [0, 0, 1, 1], [], []>} : vector<8x32xf32>, vector<32x128xf32>, vector<8x128xf32> -> vector<8x128xf32>
    %79 = arith.addf %78, %77 : vector<8x128xf32>
    %80 = arith.negf %79 : vector<8x128xf32>
    %81 = math.exp %80 : vector<8x128xf32>
    %cst_28 = arith.constant 1.000000e+00 : f32
    %82 = vector.broadcast %cst_28 : f32 to vector<8x128xf32>
    %83 = arith.addf %82, %81 : vector<8x128xf32>
    %84 = arith.divf %82, %83 : vector<8x128xf32>
    %85 = math.tanh %79 : vector<8x128xf32>
    %86 = vector.extract_strided_slice %84 {offsets = [0, 0], sizes = [8, 32], strides = [1, 1]} : vector<8x128xf32> to vector<8x32xf32>
    %87 = vector.extract_strided_slice %84 {offsets = [0, 32], sizes = [8, 32], strides = [1, 1]} : vector<8x128xf32> to vector<8x32xf32>
    %88 = vector.extract_strided_slice %85 {offsets = [0, 64], sizes = [8, 32], strides = [1, 1]} : vector<8x128xf32> to vector<8x32xf32>
    %89 = vector.extract_strided_slice %84 {offsets = [0, 96], sizes = [8, 32], strides = [1, 1]} : vector<8x128xf32> to vector<8x32xf32>
    %90 = arith.mulf %87, %74 : vector<8x32xf32>
    %91 = arith.mulf %86, %88 : vector<8x32xf32>
    %92 = arith.addf %90, %91 : vector<8x32xf32>
    %93 = math.tanh %92 : vector<8x32xf32>
    %94 = arith.mulf %89, %93 : vector<8x32xf32>
    %95 = vector.extract_strided_slice %19 {offsets = [32, 0], sizes = [8, 128], strides = [1, 1]} : vector<64x128xf32> to vector<8x128xf32>
    %cst_29 = arith.constant dense<0.000000e+00> : vector<8x128xf32>
    %96 = tpu.matmul %94, %20, %cst_29 {dimension_numbers = #tpu.dot_dimension_numbers<[1], [0], [0], [1], [0, 0, 1, 1], [], []>} : vector<8x32xf32>, vector<32x128xf32>, vector<8x128xf32> -> vector<8x128xf32>
    %97 = arith.addf %96, %95 : vector<8x128xf32>
    %98 = arith.negf %97 : vector<8x128xf32>
    %99 = math.exp %98 : vector<8x128xf32>
    %cst_30 = arith.constant 1.000000e+00 : f32
    %100 = vector.broadcast %cst_30 : f32 to vector<8x128xf32>
    %101 = arith.addf %100, %99 : vector<8x128xf32>
    %102 = arith.divf %100, %101 : vector<8x128xf32>
    %103 = math.tanh %97 : vector<8x128xf32>
    %104 = vector.extract_strided_slice %102 {offsets = [0, 0], sizes = [8, 32], strides = [1, 1]} : vector<8x128xf32> to vector<8x32xf32>
    %105 = vector.extract_strided_slice %102 {offsets = [0, 32], sizes = [8, 32], strides = [1, 1]} : vector<8x128xf32> to vector<8x32xf32>
    %106 = vector.extract_strided_slice %103 {offsets = [0, 64], sizes = [8, 32], strides = [1, 1]} : vector<8x128xf32> to vector<8x32xf32>
    %107 = vector.extract_strided_slice %102 {offsets = [0, 96], sizes = [8, 32], strides = [1, 1]} : vector<8x128xf32> to vector<8x32xf32>
    %108 = arith.mulf %105, %92 : vector<8x32xf32>
    %109 = arith.mulf %104, %106 : vector<8x32xf32>
    %110 = arith.addf %108, %109 : vector<8x32xf32>
    %111 = math.tanh %110 : vector<8x32xf32>
    %112 = arith.mulf %107, %111 : vector<8x32xf32>
    %113 = vector.extract_strided_slice %19 {offsets = [40, 0], sizes = [8, 128], strides = [1, 1]} : vector<64x128xf32> to vector<8x128xf32>
    %cst_31 = arith.constant dense<0.000000e+00> : vector<8x128xf32>
    %114 = tpu.matmul %112, %20, %cst_31 {dimension_numbers = #tpu.dot_dimension_numbers<[1], [0], [0], [1], [0, 0, 1, 1], [], []>} : vector<8x32xf32>, vector<32x128xf32>, vector<8x128xf32> -> vector<8x128xf32>
    %115 = arith.addf %114, %113 : vector<8x128xf32>
    %116 = arith.negf %115 : vector<8x128xf32>
    %117 = math.exp %116 : vector<8x128xf32>
    %cst_32 = arith.constant 1.000000e+00 : f32
    %118 = vector.broadcast %cst_32 : f32 to vector<8x128xf32>
    %119 = arith.addf %118, %117 : vector<8x128xf32>
    %120 = arith.divf %118, %119 : vector<8x128xf32>
    %121 = math.tanh %115 : vector<8x128xf32>
    %122 = vector.extract_strided_slice %120 {offsets = [0, 0], sizes = [8, 32], strides = [1, 1]} : vector<8x128xf32> to vector<8x32xf32>
    %123 = vector.extract_strided_slice %120 {offsets = [0, 32], sizes = [8, 32], strides = [1, 1]} : vector<8x128xf32> to vector<8x32xf32>
    %124 = vector.extract_strided_slice %121 {offsets = [0, 64], sizes = [8, 32], strides = [1, 1]} : vector<8x128xf32> to vector<8x32xf32>
    %125 = vector.extract_strided_slice %120 {offsets = [0, 96], sizes = [8, 32], strides = [1, 1]} : vector<8x128xf32> to vector<8x32xf32>
    %126 = arith.mulf %123, %110 : vector<8x32xf32>
    %127 = arith.mulf %122, %124 : vector<8x32xf32>
    %128 = arith.addf %126, %127 : vector<8x32xf32>
    %129 = math.tanh %128 : vector<8x32xf32>
    %130 = arith.mulf %125, %129 : vector<8x32xf32>
    %131 = vector.extract_strided_slice %19 {offsets = [48, 0], sizes = [8, 128], strides = [1, 1]} : vector<64x128xf32> to vector<8x128xf32>
    %cst_33 = arith.constant dense<0.000000e+00> : vector<8x128xf32>
    %132 = tpu.matmul %130, %20, %cst_33 {dimension_numbers = #tpu.dot_dimension_numbers<[1], [0], [0], [1], [0, 0, 1, 1], [], []>} : vector<8x32xf32>, vector<32x128xf32>, vector<8x128xf32> -> vector<8x128xf32>
    %133 = arith.addf %132, %131 : vector<8x128xf32>
    %134 = arith.negf %133 : vector<8x128xf32>
    %135 = math.exp %134 : vector<8x128xf32>
    %cst_34 = arith.constant 1.000000e+00 : f32
    %136 = vector.broadcast %cst_34 : f32 to vector<8x128xf32>
    %137 = arith.addf %136, %135 : vector<8x128xf32>
    %138 = arith.divf %136, %137 : vector<8x128xf32>
    %139 = math.tanh %133 : vector<8x128xf32>
    %140 = vector.extract_strided_slice %138 {offsets = [0, 0], sizes = [8, 32], strides = [1, 1]} : vector<8x128xf32> to vector<8x32xf32>
    %141 = vector.extract_strided_slice %138 {offsets = [0, 32], sizes = [8, 32], strides = [1, 1]} : vector<8x128xf32> to vector<8x32xf32>
    %142 = vector.extract_strided_slice %139 {offsets = [0, 64], sizes = [8, 32], strides = [1, 1]} : vector<8x128xf32> to vector<8x32xf32>
    %143 = vector.extract_strided_slice %138 {offsets = [0, 96], sizes = [8, 32], strides = [1, 1]} : vector<8x128xf32> to vector<8x32xf32>
    %144 = arith.mulf %141, %128 : vector<8x32xf32>
    %145 = arith.mulf %140, %142 : vector<8x32xf32>
    %146 = arith.addf %144, %145 : vector<8x32xf32>
    %147 = math.tanh %146 : vector<8x32xf32>
    %148 = arith.mulf %143, %147 : vector<8x32xf32>
    %149 = vector.extract_strided_slice %19 {offsets = [56, 0], sizes = [8, 128], strides = [1, 1]} : vector<64x128xf32> to vector<8x128xf32>
    %cst_35 = arith.constant dense<0.000000e+00> : vector<8x128xf32>
    %150 = tpu.matmul %148, %20, %cst_35 {dimension_numbers = #tpu.dot_dimension_numbers<[1], [0], [0], [1], [0, 0, 1, 1], [], []>} : vector<8x32xf32>, vector<32x128xf32>, vector<8x128xf32> -> vector<8x128xf32>
    %151 = arith.addf %150, %149 : vector<8x128xf32>
    %152 = arith.negf %151 : vector<8x128xf32>
    %153 = math.exp %152 : vector<8x128xf32>
    %cst_36 = arith.constant 1.000000e+00 : f32
    %154 = vector.broadcast %cst_36 : f32 to vector<8x128xf32>
    %155 = arith.addf %154, %153 : vector<8x128xf32>
    %156 = arith.divf %154, %155 : vector<8x128xf32>
    %157 = math.tanh %151 : vector<8x128xf32>
    %158 = vector.extract_strided_slice %156 {offsets = [0, 0], sizes = [8, 32], strides = [1, 1]} : vector<8x128xf32> to vector<8x32xf32>
    %159 = vector.extract_strided_slice %156 {offsets = [0, 32], sizes = [8, 32], strides = [1, 1]} : vector<8x128xf32> to vector<8x32xf32>
    %160 = vector.extract_strided_slice %157 {offsets = [0, 64], sizes = [8, 32], strides = [1, 1]} : vector<8x128xf32> to vector<8x32xf32>
    %161 = vector.extract_strided_slice %156 {offsets = [0, 96], sizes = [8, 32], strides = [1, 1]} : vector<8x128xf32> to vector<8x32xf32>
    %162 = arith.mulf %159, %146 : vector<8x32xf32>
    %163 = arith.mulf %158, %160 : vector<8x32xf32>
    %164 = arith.addf %162, %163 : vector<8x32xf32>
    %165 = math.tanh %164 : vector<8x32xf32>
    %166 = arith.mulf %161, %165 : vector<8x32xf32>
    %c0_37 = arith.constant 0 : index
    %c0_38 = arith.constant 0 : index
    %167 = vector.load %arg8[%c0_37, %c0_38] : memref<32x384xf32, #tpu.memory_space<vmem>>, vector<32x384xf32>
    %cst_39 = arith.constant dense<0.000000e+00> : vector<8x384xf32>
    %168 = tpu.matmul %166, %167, %cst_39 {dimension_numbers = #tpu.dot_dimension_numbers<[1], [0], [0], [1], [0, 0, 1, 1], [], []>} : vector<8x32xf32>, vector<32x384xf32>, vector<8x384xf32> -> vector<8x384xf32>
    %c0_40 = arith.constant 0 : index
    %c0_41 = arith.constant 0 : index
    %169 = vector.load %arg9[%c0_40, %c0_41] : memref<1x384xf32, #tpu.memory_space<vmem>>, vector<1x384xf32>
    %170 = vector.broadcast %169 : vector<1x384xf32> to vector<8x384xf32>
    %171 = arith.addf %168, %170 : vector<8x384xf32>
    %cst_42 = arith.constant 0.000000e+00 : f32
    %172 = vector.broadcast %cst_42 : f32 to vector<8x384xf32>
    %173 = arith.maximumf %171, %172 : vector<8x384xf32>
    %c0_43 = arith.constant 0 : index
    %c0_44 = arith.constant 0 : index
    %174 = vector.load %arg10[%c0_43, %c0_44] : memref<384x9xf32, #tpu.memory_space<vmem>>, vector<384x9xf32>
    %cst_45 = arith.constant dense<0.000000e+00> : vector<8x9xf32>
    %175 = tpu.matmul %173, %174, %cst_45 {dimension_numbers = #tpu.dot_dimension_numbers<[1], [0], [0], [1], [0, 0, 1, 1], [], []>} : vector<8x384xf32>, vector<384x9xf32>, vector<8x9xf32> -> vector<8x9xf32>
    %c0_46 = arith.constant 0 : index
    %c0_47 = arith.constant 0 : index
    %176 = vector.load %arg11[%c0_46, %c0_47] : memref<1x9xf32, #tpu.memory_space<vmem>>, vector<1x9xf32>
    %177 = vector.broadcast %176 : vector<1x9xf32> to vector<8x9xf32>
    %178 = arith.addf %175, %177 : vector<8x9xf32>
    %179 = tpu.iota {dimensions = array<i32: 1>} : vector<8x9xi32>
    %c4_i32 = arith.constant 4 : i32
    %180 = vector.broadcast %c4_i32 : i32 to vector<8x9xi32>
    %181 = arith.cmpi sge, %179, %180 : vector<8x9xi32>
    %c8_i32 = arith.constant 8 : i32
    %182 = vector.broadcast %c8_i32 : i32 to vector<8x9xi32>
    %183 = arith.cmpi slt, %179, %182 : vector<8x9xi32>
    %184 = arith.andi %181, %183 : vector<8x9xi1>
    %cst_48 = arith.constant 2.000000e+01 : f32
    %185 = vector.broadcast %cst_48 : f32 to vector<8x9xf32>
    %186 = arith.cmpf ogt, %178, %185 : vector<8x9xf32>
    %cst_49 = arith.constant 2.000000e+01 : f32
    %187 = vector.broadcast %cst_49 : f32 to vector<8x9xf32>
    %188 = arith.minimumf %178, %187 : vector<8x9xf32>
    %189 = math.exp %188 : vector<8x9xf32>
    %190 = math.log1p %189 : vector<8x9xf32>
    %191 = arith.select %186, %178, %190 : vector<8x9xi1>, vector<8x9xf32>
    %cst_50 = arith.constant 9.99999997E-7 : f32
    %192 = vector.broadcast %cst_50 : f32 to vector<8x9xf32>
    %193 = arith.addf %191, %192 : vector<8x9xf32>
    %194 = arith.select %184, %193, %178 : vector<8x9xi1>, vector<8x9xf32>
    %cst_51 = arith.constant 0.000000e+00 : f32
    %195 = vector.broadcast %cst_51 : f32 to vector<8x55xf32>
    %196 = tpu.concatenate %194, %166, %164, %195 in 1 : vector<8x9xf32>, vector<8x32xf32>, vector<8x32xf32>, vector<8x55xf32> -> vector<8x128xf32>
    %c0_52 = arith.constant 0 : index
    %c0_53 = arith.constant 0 : index
    %197 = vector.load %arg12[%c0_52, %c0_53] : memref<8x128xf32, #tpu.memory_space<vmem>>, vector<8x128xf32>
    tpu.vector_store %arg12[%c0_52, %c0_53], %196 {strides = array<i32>} : memref<8x128xf32, #tpu.memory_space<vmem>>, vector<8x128xf32>,
    return
  }
}

</mosaic_0001>

<llo_original>
// kernel: tpu_custom_call.1
$region0: #{tpu_custom_call.1}
  #allocation0 [shape = 'u32[]', space=smem, size = 0x4, offset = 0x4, fixed_abs, tag = 'smem constant byte address 0x4 - core index']
  #allocation1 [shape = 'u32[72,128]{1,0:T(1,128)}', space=vmem, size = 0x9000, scoped, tag = 'internal scratch']
  %s0 = inlined_call_operand.vmem [shape: f32[64,16], index: 0, kind: input, shape index: {}]
  %s1 = inlined_call_operand.vmem [shape: f32[16,256], index: 1, kind: input, shape index: {}]
  %s2 = inlined_call_operand.vmem [shape: f32[1,256], index: 2, kind: input, shape index: {}]
  %s3 = inlined_call_operand.vmem [shape: f32[256,32], index: 3, kind: input, shape index: {}]
  %s4 = inlined_call_operand.vmem [shape: f32[1,32], index: 4, kind: input, shape index: {}]
  %s5 = inlined_call_operand.vmem [shape: f32[32,128], index: 5, kind: input, shape index: {}]
  %s6 = inlined_call_operand.vmem [shape: f32[32,128], index: 6, kind: input, shape index: {}]
  %s7 = inlined_call_operand.vmem [shape: f32[1,128], index: 7, kind: input, shape index: {}]
  %s8 = inlined_call_operand.vmem [shape: f32[32,384], index: 8, kind: input, shape index: {}]
  %s9 = inlined_call_operand.vmem [shape: f32[1,384], index: 9, kind: input, shape index: {}]
  %s10 = inlined_call_operand.vmem [shape: f32[384,9], index: 10, kind: input, shape index: {}]
  %s11 = inlined_call_operand.vmem [shape: f32[1,9], index: 11, kind: input, shape index: {}]
  %s12 = inlined_call_operand.hbm [shape: f32[8,128], index: 12, kind: output, shape index: {}]
  %s13 = sld [smem:[#allocation0]]
  $region58: #{tpu_custom_call.1} parent=0
    _
  %s15 = ssub.s32 1, %s13
  %s16 = scalar_select 0, %s15, %s13
  $region1: #{tpu_custom_call.1} parent=0
    #allocation2 [shape = 'u8[4096]{0}', space=vmem, size = 0x1000, scoped, tag = 'output window, operand 0, single buffered']
    #allocation3 [shape = 's32[1]{0}', space=sflag, size = 0x4, scoped, tag = 'scoped memory for tpu_custom_call.1']
    %17 = vsyncpa [#allocation3], 0
    // Predicated region
    $region2: #{tpu_custom_call.1} parent=1 // pred_check
      _
    $region3: #{tpu_custom_call.1} parent=1 // pred_check_branch
      %19 = sbr.rel (0) target = $region5
    $region4: #{tpu_custom_call.1} parent=1 // pred_region
      _
    $region5: #{tpu_custom_call.1} parent=1 // pred_fallthru
      _
    // Predicated region
    $region6: #{tpu_custom_call.1} parent=1 // pred_check
      _
    $region7: #{tpu_custom_call.1} parent=1 // pred_check_branch
      %21 = sbr.rel (0) target = $region9
    $region8: #{tpu_custom_call.1} parent=1 // pred_region
      _
    $region9: #{tpu_custom_call.1} parent=1 // pred_fallthru
      _
    // Predicated region
    $region10: #{tpu_custom_call.1} parent=1 // pred_check
      _
    $region11: #{tpu_custom_call.1} parent=1 // pred_check_branch
      %23 = sbr.rel (0) target = $region13
    $region12: #{tpu_custom_call.1} parent=1 // pred_region
      _
    $region13: #{tpu_custom_call.1} parent=1 // pred_fallthru
      _
    // Predicated region
    $region14: #{tpu_custom_call.1} parent=1 // pred_check
      _
    $region15: #{tpu_custom_call.1} parent=1 // pred_check_branch
      %25 = sbr.rel (0) target = $region17
    $region16: #{tpu_custom_call.1} parent=1 // pred_region
      _
    $region17: #{tpu_custom_call.1} parent=1 // pred_fallthru
      _
    // Predicated region
    $region18: #{tpu_custom_call.1} parent=1 // pred_check
      _
    $region19: #{tpu_custom_call.1} parent=1 // pred_check_branch
      %27 = sbr.rel (0) target = $region21
    $region20: #{tpu_custom_call.1} parent=1 // pred_region
      _
    $region21: #{tpu_custom_call.1} parent=1 // pred_fallthru
      _
    // Predicated region
    $region22: #{tpu_custom_call.1} parent=1 // pred_check
      _
    $region23: #{tpu_custom_call.1} parent=1 // pred_check_branch
      %29 = sbr.rel (0) target = $region25
    $region24: #{tpu_custom_call.1} parent=1 // pred_region
      _
    $region25: #{tpu_custom_call.1} parent=1 // pred_fallthru
      _
    // Predicated region
    $region26: #{tpu_custom_call.1} parent=1 // pred_check
      _
    $region27: #{tpu_custom_call.1} parent=1 // pred_check_branch
      %31 = sbr.rel (0) target = $region29
    $region28: #{tpu_custom_call.1} parent=1 // pred_region
      _
    $region29: #{tpu_custom_call.1} parent=1 // pred_fallthru
      _
    // Predicated region
    $region30: #{tpu_custom_call.1} parent=1 // pred_check
      _
    $region31: #{tpu_custom_call.1} parent=1 // pred_check_branch
      %33 = sbr.rel (0) target = $region33
    $region32: #{tpu_custom_call.1} parent=1 // pred_region
      _
    $region33: #{tpu_custom_call.1} parent=1 // pred_fallthru
      _
    // Predicated region
    $region34: #{tpu_custom_call.1} parent=1 // pred_check
      _
    $region35: #{tpu_custom_call.1} parent=1 // pred_check_branch
      %35 = sbr.rel (0) target = $region37
    $region36: #{tpu_custom_call.1} parent=1 // pred_region
      _
    $region37: #{tpu_custom_call.1} parent=1 // pred_fallthru
      _
    // Predicated region
    $region38: #{tpu_custom_call.1} parent=1 // pred_check
      _
    $region39: #{tpu_custom_call.1} parent=1 // pred_check_branch
      %37 = sbr.rel (0) target = $region41
    $region40: #{tpu_custom_call.1} parent=1 // pred_region
      _
    $region41: #{tpu_custom_call.1} parent=1 // pred_fallthru
      _
    // Predicated region
    $region42: #{tpu_custom_call.1} parent=1 // pred_check
      _
    $region43: #{tpu_custom_call.1} parent=1 // pred_check_branch
      %39 = sbr.rel (0) target = $region45
    $region44: #{tpu_custom_call.1} parent=1 // pred_region
      _
    $region45: #{tpu_custom_call.1} parent=1 // pred_fallthru
      _
    // Predicated region
    $region46: #{tpu_custom_call.1} parent=1 // pred_check
      _
    $region47: #{tpu_custom_call.1} parent=1 // pred_check_branch
      %41 = sbr.rel (0) target = $region49
    $region48: #{tpu_custom_call.1} parent=1 // pred_region
      _
    $region49: #{tpu_custom_call.1} parent=1 // pred_fallthru
      _
    %v42 = vld [vmem:[%s0] sm:$0xff]
    %v43 = vld [vmem:[%s0 + $0x8] sm:$0xff]
    %v44 = vld [vmem:[%s0 + $0x10] sm:$0xff]
    %v45 = vld [vmem:[%s0 + $0x18] sm:$0xff]
    %v46 = vld [vmem:[%s0 + $0x20] sm:$0xff]
    %v47 = vld [vmem:[%s0 + $0x28] sm:$0xff]
    %v48 = vld [vmem:[%s0 + $0x30] sm:$0xff]
    %v49 = vld [vmem:[%s0 + $0x38] sm:$0xff]
    %v50 = vld [vmem:[%s1] sm:$0xff]
    %v51 = vld [vmem:[%s1 + $0x8] sm:$0xff]
    %v52 = vld [vmem:[%s1 + $0x10] sm:$0xff]
    %v53 = vld [vmem:[%s1 + $0x18] sm:$0xff]
    %v54 = vld [vmem:[%s2] sm:$0x3]
    %v56 = vperm.slane %v54, 0
    %v57 = vperm.slane %v54, 1
    %vm60 = vcmask 130048
    %v62 = vsel %vm60, %v42, 0
    %v65 = vsel %vm60, %v43, 0
    %v68 = vsel %vm60, %v44, 0
    %v71 = vsel %vm60, %v45, 0
    %v74 = vsel %vm60, %v46, 0
    %v77 = vsel %vm60, %v47, 0
    %v80 = vsel %vm60, %v48, 0
    %v83 = vsel %vm60, %v49, 0
    %85 = vmatpush.msra.mxu0 0.0
    %86 = vmatpush.msra.mxu0 0.0
    %87 = vmatpush.msra.mxu0 0.0
    %88 = vmatpush.msra.mxu0 0.0
    %89 = vmatpush.msra.mxu0 0.0
    %90 = vmatpush.msra.mxu0 0.0
    %91 = vmatpush.msra.mxu0 0.0
    %92 = vmatpush.msra.mxu0 0.0
    %93 = vmatpush.msra.mxu0 0.0
    %94 = vmatpush.msra.mxu0 0.0
    %95 = vmatpush.msra.mxu0 0.0
    %96 = vmatpush.msra.mxu0 0.0
    %97 = vmatpush.msra.mxu0 0.0
    %98 = vmatpush.msra.mxu0 0.0
    %99 = vmatpush.msra.mxu0 %v52
    %100 = vmatpush.msra.mxu0 %v50
    %101 = vmatmul.f32.gmra.mxu0 %v62
    %v102 = vpop.f32.mrf.mxu0
    %v103 = vadd.f32 %v56, %v102
    %104 = vmatmul.f32.gmra.mxu0 %v65
    %v105 = vpop.f32.mrf.mxu0
    %v106 = vadd.f32 %v56, %v105
    %107 = vmatmul.f32.gmra.mxu0 %v68
    %v108 = vpop.f32.mrf.mxu0
    %v109 = vadd.f32 %v56, %v108
    %110 = vmatmul.f32.gmra.mxu0 %v71
    %v111 = vpop.f32.mrf.mxu0
    %v112 = vadd.f32 %v56, %v111
    %113 = vmatmul.f32.gmra.mxu0 %v74
    %v114 = vpop.f32.mrf.mxu0
    %v115 = vadd.f32 %v56, %v114
    %116 = vmatmul.f32.gmra.mxu0 %v77
    %v117 = vpop.f32.mrf.mxu0
    %v118 = vadd.f32 %v56, %v117
    %119 = vmatmul.f32.gmra.mxu0 %v80
    %v120 = vpop.f32.mrf.mxu0
    %v121 = vadd.f32 %v56, %v120
    %122 = vmatmul.f32.gmra.mxu0 %v83
    %v123 = vpop.f32.mrf.mxu0
    %v124 = vadd.f32 %v56, %v123
    %125 = vdwg.mxu0
    %126 = vmatpush.msra.mxu0 0.0
    %127 = vmatpush.msra.mxu0 0.0
    %128 = vmatpush.msra.mxu0 0.0
    %129 = vmatpush.msra.mxu0 0.0
    %130 = vmatpush.msra.mxu0 0.0
    %131 = vmatpush.msra.mxu0 0.0
    %132 = vmatpush.msra.mxu0 0.0
    %133 = vmatpush.msra.mxu0 0.0
    %134 = vmatpush.msra.mxu0 0.0
    %135 = vmatpush.msra.mxu0 0.0
    %136 = vmatpush.msra.mxu0 0.0
    %137 = vmatpush.msra.mxu0 0.0
    %138 = vmatpush.msra.mxu0 0.0
    %139 = vmatpush.msra.mxu0 0.0
    %140 = vmatpush.msra.mxu0 %v53
    %141 = vmatpush.msra.mxu0 %v51
    %142 = vmatmul.f32.gmra.mxu0 %v62
    %v143 = vpop.f32.mrf.mxu0
    %v144 = vadd.f32 %v57, %v143
    %145 = vmatmul.f32.gmra.mxu0 %v65
    %v146 = vpop.f32.mrf.mxu0
    %v147 = vadd.f32 %v57, %v146
    %148 = vmatmul.f32.gmra.mxu0 %v68
    %v149 = vpop.f32.mrf.mxu0
    %v150 = vadd.f32 %v57, %v149
    %151 = vmatmul.f32.gmra.mxu0 %v71
    %v152 = vpop.f32.mrf.mxu0
    %v153 = vadd.f32 %v57, %v152
    %154 = vmatmul.f32.gmra.mxu0 %v74
    %v155 = vpop.f32.mrf.mxu0
    %v156 = vadd.f32 %v57, %v155
    %157 = vmatmul.f32.gmra.mxu0 %v77
    %v158 = vpop.f32.mrf.mxu0
    %v159 = vadd.f32 %v57, %v158
    %160 = vmatmul.f32.gmra.mxu0 %v80
    %v161 = vpop.f32.mrf.mxu0
    %v162 = vadd.f32 %v57, %v161
    %163 = vmatmul.f32.gmra.mxu0 %v83
    %v164 = vpop.f32.mrf.mxu0
    %v165 = vadd.f32 %v57, %v164
    %166 = vdwg.mxu0
    %v167 = vmax.f32 %v103, 0.0
    %v168 = vmax.f32 %v144, 0.0
    %v169 = vmax.f32 %v106, 0.0
    %v170 = vmax.f32 %v147, 0.0
    %v171 = vmax.f32 %v109, 0.0
    %v172 = vmax.f32 %v150, 0.0
    %v173 = vmax.f32 %v112, 0.0
    %v174 = vmax.f32 %v153, 0.0
    %v175 = vmax.f32 %v115, 0.0
    %v176 = vmax.f32 %v156, 0.0
    %v177 = vmax.f32 %v118, 0.0
    %v178 = vmax.f32 %v159, 0.0
    %v179 = vmax.f32 %v121, 0.0
    %v180 = vmax.f32 %v162, 0.0
    %v181 = vmax.f32 %v124, 0.0
    %v182 = vmax.f32 %v165, 0.0
    %v183 = vld [vmem:[%s3] sm:$0xff]
    %v184 = vld [vmem:[%s3 + $0x8] sm:$0xff]
    %v185 = vld [vmem:[%s3 + $0x10] sm:$0xff]
    %v186 = vld [vmem:[%s3 + $0x18] sm:$0xff]
    %v187 = vld [vmem:[%s3 + $0x20] sm:$0xff]
    %v188 = vld [vmem:[%s3 + $0x28] sm:$0xff]
    %v189 = vld [vmem:[%s3 + $0x30] sm:$0xff]
    %v190 = vld [vmem:[%s3 + $0x38] sm:$0xff]
    %v191 = vld [vmem:[%s3 + $0x40] sm:$0xff]
    %v192 = vld [vmem:[%s3 + $0x48] sm:$0xff]
    %v193 = vld [vmem:[%s3 + $0x50] sm:$0xff]
    %v194 = vld [vmem:[%s3 + $0x58] sm:$0xff]
    %v195 = vld [vmem:[%s3 + $0x60] sm:$0xff]
    %v196 = vld [vmem:[%s3 + $0x68] sm:$0xff]
    %v197 = vld [vmem:[%s3 + $0x70] sm:$0xff]
    %v198 = vld [vmem:[%s3 + $0x78] sm:$0xff]
    %v199 = vld [vmem:[%s3 + $0x80] sm:$0xff]
    %v200 = vld [vmem:[%s3 + $0x88] sm:$0xff]
    %v201 = vld [vmem:[%s3 + $0x90] sm:$0xff]
    %v202 = vld [vmem:[%s3 + $0x98] sm:$0xff]
    %v203 = vld [vmem:[%s3 + $0xa0] sm:$0xff]
    %v204 = vld [vmem:[%s3 + $0xa8] sm:$0xff]
    %v205 = vld [vmem:[%s3 + $0xb0] sm:$0xff]
    %v206 = vld [vmem:[%s3 + $0xb8] sm:$0xff]
    %v207 = vld [vmem:[%s3 + $0xc0] sm:$0xff]
    %v208 = vld [vmem:[%s3 + $0xc8] sm:$0xff]
    %v209 = vld [vmem:[%s3 + $0xd0] sm:$0xff]
    %v210 = vld [vmem:[%s3 + $0xd8] sm:$0xff]
    %v211 = vld [vmem:[%s3 + $0xe0] sm:$0xff]
    %v212 = vld [vmem:[%s3 + $0xe8] sm:$0xff]
    %v213 = vld [vmem:[%s3 + $0xf0] sm:$0xff]
    %v214 = vld [vmem:[%s3 + $0xf8] sm:$0xff]
    %v215 = vld [vmem:[%s4] sm:$0x1]
    %v217 = vperm.slane %v215, 0
    %219 = vmatpush.msra.mxu0 %v198
    %220 = vmatpush.msra.mxu0 %v197
    %221 = vmatpush.msra.mxu0 %v196
    %222 = vmatpush.msra.mxu0 %v195
    %223 = vmatpush.msra.mxu0 %v194
    %224 = vmatpush.msra.mxu0 %v193
    %225 = vmatpush.msra.mxu0 %v192
    %226 = vmatpush.msra.mxu0 %v191
    %227 = vmatpush.msra.mxu0 %v190
    %228 = vmatpush.msra.mxu0 %v189
    %229 = vmatpush.msra.mxu0 %v188
    %230 = vmatpush.msra.mxu0 %v187
    %231 = vmatpush.msra.mxu0 %v186
    %232 = vmatpush.msra.mxu0 %v185
    %233 = vmatpush.msra.mxu0 %v184
    %234 = vmatpush.msra.mxu0 %v183
    %235 = vmatmul.f32.gmra.mxu0 %v167
    %v236 = vpop.f32.mrf.mxu0
    %v237 = vadd.f32 %v217, %v236
    %238 = vmatmul.f32.gmra.mxu0 %v169
    %v239 = vpop.f32.mrf.mxu0
    %v240 = vadd.f32 %v217, %v239
    %241 = vmatmul.f32.gmra.mxu0 %v171
    %v242 = vpop.f32.mrf.mxu0
    %v243 = vadd.f32 %v217, %v242
    %244 = vmatmul.f32.gmra.mxu0 %v173
    %v245 = vpop.f32.mrf.mxu0
    %v246 = vadd.f32 %v217, %v245
    %247 = vmatmul.f32.gmra.mxu0 %v175
    %v248 = vpop.f32.mrf.mxu0
    %v249 = vadd.f32 %v217, %v248
    %250 = vmatmul.f32.gmra.mxu0 %v177
    %v251 = vpop.f32.mrf.mxu0
    %v252 = vadd.f32 %v217, %v251
    %253 = vmatmul.f32.gmra.mxu0 %v179
    %v254 = vpop.f32.mrf.mxu0
    %v255 = vadd.f32 %v217, %v254
    %256 = vmatmul.f32.gmra.mxu0 %v181
    %v257 = vpop.f32.mrf.mxu0
    %v258 = vadd.f32 %v217, %v257
    %259 = vdwg.mxu0
    %260 = vmatpush.msra.mxu0 %v214
    %261 = vmatpush.msra.mxu0 %v213
    %262 = vmatpush.msra.mxu0 %v212
    %263 = vmatpush.msra.mxu0 %v211
    %264 = vmatpush.msra.mxu0 %v210
    %265 = vmatpush.msra.mxu0 %v209
    %266 = vmatpush.msra.mxu0 %v208
    %267 = vmatpush.msra.mxu0 %v207
    %268 = vmatpush.msra.mxu0 %v206
    %269 = vmatpush.msra.mxu0 %v205
    %270 = vmatpush.msra.mxu0 %v204
    %271 = vmatpush.msra.mxu0 %v203
    %272 = vmatpush.msra.mxu0 %v202
    %273 = vmatpush.msra.mxu0 %v201
    %274 = vmatpush.msra.mxu0 %v200
    %275 = vmatpush.msra.mxu0 %v199
    %276 = vmatmul.f32.gmra.mxu0 %v168
    %v277 = vpop.f32.mrf.mxu0
    %v278 = vadd.f32 %v237, %v277
    %279 = vmatmul.f32.gmra.mxu0 %v170
    %v280 = vpop.f32.mrf.mxu0
    %v281 = vadd.f32 %v240, %v280
    %282 = vmatmul.f32.gmra.mxu0 %v172
    %v283 = vpop.f32.mrf.mxu0
    %v284 = vadd.f32 %v243, %v283
    %285 = vmatmul.f32.gmra.mxu0 %v174
    %v286 = vpop.f32.mrf.mxu0
    %v287 = vadd.f32 %v246, %v286
    %288 = vmatmul.f32.gmra.mxu0 %v176
    %v289 = vpop.f32.mrf.mxu0
    %v290 = vadd.f32 %v249, %v289
    %291 = vmatmul.f32.gmra.mxu0 %v178
    %v292 = vpop.f32.mrf.mxu0
    %v293 = vadd.f32 %v252, %v292
    %294 = vmatmul.f32.gmra.mxu0 %v180
    %v295 = vpop.f32.mrf.mxu0
    %v296 = vadd.f32 %v255, %v295
    %297 = vmatmul.f32.gmra.mxu0 %v182
    %v298 = vpop.f32.mrf.mxu0
    %v299 = vadd.f32 %v258, %v298
    %300 = vdwg.mxu0
    %v301 = vmax.f32 %v278, 0.0
    %v302 = vmax.f32 %v281, 0.0
    %v303 = vmax.f32 %v284, 0.0
    %v304 = vmax.f32 %v287, 0.0
    %v305 = vmax.f32 %v290, 0.0
    %v306 = vmax.f32 %v293, 0.0
    %v307 = vmax.f32 %v296, 0.0
    %v308 = vmax.f32 %v299, 0.0
    %v309 = vld [vmem:[%s5] sm:$0xff]
    %v310 = vld [vmem:[%s5 + $0x8] sm:$0xff]
    %v311 = vld [vmem:[%s5 + $0x10] sm:$0xff]
    %v312 = vld [vmem:[%s5 + $0x18] sm:$0xff]
    %v313 = vld [vmem:[%s7] sm:$0x1]
    %v315 = vperm.slane %v313, 0
    %vm317 = vcmask 261120
    %v319 = vsel %vm317, %v301, 0
    %v322 = vsel %vm317, %v302, 0
    %v325 = vsel %vm317, %v303, 0
    %v328 = vsel %vm317, %v304, 0
    %v331 = vsel %vm317, %v305, 0
    %v334 = vsel %vm317, %v306, 0
    %v337 = vsel %vm317, %v307, 0
    %v340 = vsel %vm317, %v308, 0
    %342 = vmatpush.msra.mxu0 0.0
    %343 = vmatpush.msra.mxu0 0.0
    %344 = vmatpush.msra.mxu0 0.0
    %345 = vmatpush.msra.mxu0 0.0
    %346 = vmatpush.msra.mxu0 0.0
    %347 = vmatpush.msra.mxu0 0.0
    %348 = vmatpush.msra.mxu0 0.0
    %349 = vmatpush.msra.mxu0 0.0
    %350 = vmatpush.msra.mxu0 0.0
    %351 = vmatpush.msra.mxu0 0.0
    %352 = vmatpush.msra.mxu0 0.0
    %353 = vmatpush.msra.mxu0 0.0
    %354 = vmatpush.msra.mxu0 %v312
    %355 = vmatpush.msra.mxu0 %v311
    %356 = vmatpush.msra.mxu0 %v310
    %357 = vmatpush.msra.mxu0 %v309
    %358 = vmatmul.f32.gmra.mxu0 %v319
    %v359 = vpop.f32.mrf.mxu0
    %v360 = vadd.f32 %v315, %v359
    %361 = vmatmul.f32.gmra.mxu0 %v322
    %v362 = vpop.f32.mrf.mxu0
    %v363 = vadd.f32 %v315, %v362
    %364 = vmatmul.f32.gmra.mxu0 %v325
    %v365 = vpop.f32.mrf.mxu0
    %v366 = vadd.f32 %v315, %v365
    %367 = vmatmul.f32.gmra.mxu0 %v328
    %v368 = vpop.f32.mrf.mxu0
    %v369 = vadd.f32 %v315, %v368
    %370 = vmatmul.f32.gmra.mxu0 %v331
    %v371 = vpop.f32.mrf.mxu0
    %v372 = vadd.f32 %v315, %v371
    %373 = vmatmul.f32.gmra.mxu0 %v334
    %v374 = vpop.f32.mrf.mxu0
    %v375 = vadd.f32 %v315, %v374
    %376 = vmatmul.f32.gmra.mxu0 %v337
    %v377 = vpop.f32.mrf.mxu0
    %v378 = vadd.f32 %v315, %v377
    %379 = vmatmul.f32.gmra.mxu0 %v340
    %v380 = vpop.f32.mrf.mxu0
    %v381 = vadd.f32 %v315, %v380
    %382 = vdwg.mxu0
    %v383 = vld [vmem:[%s6] sm:$0xff]
    %v384 = vld [vmem:[%s6 + $0x8] sm:$0xff]
    %v385 = vld [vmem:[%s6 + $0x10] sm:$0xff]
    %v386 = vld [vmem:[%s6 + $0x18] sm:$0xff]
    %v388 = vsel %vm317, 0.0, 0
    %390 = vmatpush.msra.mxu0 0.0
    %391 = vmatpush.msra.mxu0 0.0
    %392 = vmatpush.msra.mxu0 0.0
    %393 = vmatpush.msra.mxu0 0.0
    %394 = vmatpush.msra.mxu0 0.0
    %395 = vmatpush.msra.mxu0 0.0
    %396 = vmatpush.msra.mxu0 0.0
    %397 = vmatpush.msra.mxu0 0.0
    %398 = vmatpush.msra.mxu0 0.0
    %399 = vmatpush.msra.mxu0 0.0
    %400 = vmatpush.msra.mxu0 0.0
    %401 = vmatpush.msra.mxu0 0.0
    %402 = vmatpush.msra.mxu0 %v386
    %403 = vmatpush.msra.mxu0 %v385
    %404 = vmatpush.msra.mxu0 %v384
    %405 = vmatpush.msra.mxu0 %v383
    %406 = vmatmul.f32.gmra.mxu0 %v388
    %v407 = vpop.f32.mrf.mxu0
    %v408 = vadd.f32 %v360, %v407
    %409 = vdwg.mxu0
    %v410 = vxor.u32 %v408, 2147483648
    %v411 = vmul.f32 %v410, 1.442695
    %v412 = vpow.pop %v411
    %v413 = vadd.f32 %v412, 1.0
    %v414 = vrcp.pop %v413
    %v415 = vmul.f32 %v413, %v414
    %v416 = vsub.f32 1.0, %v415
    %v417 = vmul.f32 %v414, %v416
    %v418 = vadd.f32 %v414, %v417
    %vm419 = vweird.f32 %v413
    %vm420 = vweird.f32 %v414
    %vm421 = vmor %vm419, %vm420
    %v422 = vsel %vm421, %v414, %v418
    %v423 = vand.u32 2147483647, %v413
    %vm424 = vcmp.eq.f32.partialorder %v423, 8.507059e+37
    %v425 = vand.u32 %v413, 2147483648
    %v426 = vor.u32 1.1754944e-38, %v425
    %v427 = vsel %vm424, %v426, %v422
    %v428 = vmul.f32 1.0, %v427
    %v429 = vtanh.pop %v408
    %v430 = vmul.f32 %v428, 0.0
    %432 = vrot.lane.b32.xlu0 %v429, 64
    %v433 = vpop.permute.xlu0 %432
    %v435 = vmul.f32 %v428, %v433
    %437 = vrot.lane.b32.xlu0 %v435, 32
    %v438 = vpop.permute.xlu0 %437
    %v440 = vadd.f32 %v430, %v438
    %v441 = vtanh.pop %v440
    %443 = vrot.lane.b32.xlu0 %v441, 64
    %v444 = vpop.permute.xlu0 %443
    %v446 = vmul.f32 %v428, %v444
    %448 = vrot.lane.b32.xlu0 %v446, 32
    %v449 = vpop.permute.xlu0 %448
    %v450 = vsel %vm317, %v449, 0
    %452 = vmatpush.msra.mxu0 0.0
    %453 = vmatpush.msra.mxu0 0.0
    %454 = vmatpush.msra.mxu0 0.0
    %455 = vmatpush.msra.mxu0 0.0
    %456 = vmatpush.msra.mxu0 0.0
    %457 = vmatpush.msra.mxu0 0.0
    %458 = vmatpush.msra.mxu0 0.0
    %459 = vmatpush.msra.mxu0 0.0
    %460 = vmatpush.msra.mxu0 0.0
    %461 = vmatpush.msra.mxu0 0.0
    %462 = vmatpush.msra.mxu0 0.0
    %463 = vmatpush.msra.mxu0 0.0
    %464 = vmatpush.msra.mxu0 %v386
    %465 = vmatpush.msra.mxu0 %v385
    %466 = vmatpush.msra.mxu0 %v384
    %467 = vmatpush.msra.mxu0 %v383
    %468 = vmatmul.f32.gmra.mxu0 %v450
    %v469 = vpop.f32.mrf.mxu0
    %v470 = vadd.f32 %v363, %v469
    %471 = vdwg.mxu0
    %v472 = vxor.u32 %v470, 2147483648
    %v473 = vmul.f32 %v472, 1.442695
    %v474 = vpow.pop %v473
    %v475 = vadd.f32 %v474, 1.0
    %v476 = vrcp.pop %v475
    %v477 = vmul.f32 %v475, %v476
    %v478 = vsub.f32 1.0, %v477
    %v479 = vmul.f32 %v476, %v478
    %v480 = vadd.f32 %v476, %v479
    %vm481 = vweird.f32 %v475
    %vm482 = vweird.f32 %v476
    %vm483 = vmor %vm481, %vm482
    %v484 = vsel %vm483, %v476, %v480
    %v485 = vand.u32 2147483647, %v475
    %vm486 = vcmp.eq.f32.partialorder %v485, 8.507059e+37
    %v487 = vand.u32 %v475, 2147483648
    %v488 = vor.u32 1.1754944e-38, %v487
    %v489 = vsel %vm486, %v488, %v484
    %v490 = vmul.f32 1.0, %v489
    %v491 = vtanh.pop %v470
    %v492 = vmul.f32 %v490, %v440
    %494 = vrot.lane.b32.xlu0 %v491, 64
    %v495 = vpop.permute.xlu0 %494
    %v497 = vmul.f32 %v490, %v495
    %499 = vrot.lane.b32.xlu0 %v497, 32
    %v500 = vpop.permute.xlu0 %499
    %v502 = vadd.f32 %v492, %v500
    %v503 = vtanh.pop %v502
    %505 = vrot.lane.b32.xlu0 %v503, 64
    %v506 = vpop.permute.xlu0 %505
    %v508 = vmul.f32 %v490, %v506
    %510 = vrot.lane.b32.xlu0 %v508, 32
    %v511 = vpop.permute.xlu0 %510
    %v512 = vsel %vm317, %v511, 0
    %514 = vmatpush.msra.mxu0 0.0
    %515 = vmatpush.msra.mxu0 0.0
    %516 = vmatpush.msra.mxu0 0.0
    %517 = vmatpush.msra.mxu0 0.0
    %518 = vmatpush.msra.mxu0 0.0
    %519 = vmatpush.msra.mxu0 0.0
    %520 = vmatpush.msra.mxu0 0.0
    %521 = vmatpush.msra.mxu0 0.0
    %522 = vmatpush.msra.mxu0 0.0
    %523 = vmatpush.msra.mxu0 0.0
    %524 = vmatpush.msra.mxu0 0.0
    %525 = vmatpush.msra.mxu0 0.0
    %526 = vmatpush.msra.mxu0 %v386
    %527 = vmatpush.msra.mxu0 %v385
    %528 = vmatpush.msra.mxu0 %v384
    %529 = vmatpush.msra.mxu0 %v383
    %530 = vmatmul.f32.gmra.mxu0 %v512
    %v531 = vpop.f32.mrf.mxu0
    %v532 = vadd.f32 %v366, %v531
    %533 = vdwg.mxu0
    %v534 = vxor.u32 %v532, 2147483648
    %v535 = vmul.f32 %v534, 1.442695
    %v536 = vpow.pop %v535
    %v537 = vadd.f32 %v536, 1.0
    %v538 = vrcp.pop %v537
    %v539 = vmul.f32 %v537, %v538
    %v540 = vsub.f32 1.0, %v539
    %v541 = vmul.f32 %v538, %v540
    %v542 = vadd.f32 %v538, %v541
    %vm543 = vweird.f32 %v537
    %vm544 = vweird.f32 %v538
    %vm545 = vmor %vm543, %vm544
    %v546 = vsel %vm545, %v538, %v542
    %v547 = vand.u32 2147483647, %v537
    %vm548 = vcmp.eq.f32.partialorder %v547, 8.507059e+37
    %v549 = vand.u32 %v537, 2147483648
    %v550 = vor.u32 1.1754944e-38, %v549
    %v551 = vsel %vm548, %v550, %v546
    %v552 = vmul.f32 1.0, %v551
    %v553 = vtanh.pop %v532
    %v554 = vmul.f32 %v552, %v502
    %556 = vrot.lane.b32.xlu0 %v553, 64
    %v557 = vpop.permute.xlu0 %556
    %v559 = vmul.f32 %v552, %v557
    %561 = vrot.lane.b32.xlu0 %v559, 32
    %v562 = vpop.permute.xlu0 %561
    %v564 = vadd.f32 %v554, %v562
    %v565 = vtanh.pop %v564
    %567 = vrot.lane.b32.xlu0 %v565, 64
    %v568 = vpop.permute.xlu0 %567
    %v570 = vmul.f32 %v552, %v568
    %572 = vrot.lane.b32.xlu0 %v570, 32
    %v573 = vpop.permute.xlu0 %572
    %v574 = vsel %vm317, %v573, 0
    %576 = vmatpush.msra.mxu0 0.0
    %577 = vmatpush.msra.mxu0 0.0
    %578 = vmatpush.msra.mxu0 0.0
    %579 = vmatpush.msra.mxu0 0.0
    %580 = vmatpush.msra.mxu0 0.0
    %581 = vmatpush.msra.mxu0 0.0
    %582 = vmatpush.msra.mxu0 0.0
    %583 = vmatpush.msra.mxu0 0.0
    %584 = vmatpush.msra.mxu0 0.0
    %585 = vmatpush.msra.mxu0 0.0
    %586 = vmatpush.msra.mxu0 0.0
    %587 = vmatpush.msra.mxu0 0.0
    %588 = vmatpush.msra.mxu0 %v386
    %589 = vmatpush.msra.mxu0 %v385
    %590 = vmatpush.msra.mxu0 %v384
    %591 = vmatpush.msra.mxu0 %v383
    %592 = vmatmul.f32.gmra.mxu0 %v574
    %v593 = vpop.f32.mrf.mxu0
    %v594 = vadd.f32 %v369, %v593
    %595 = vdwg.mxu0
    %v596 = vxor.u32 %v594, 2147483648
    %v597 = vmul.f32 %v596, 1.442695
    %v598 = vpow.pop %v597
    %v599 = vadd.f32 %v598, 1.0
    %v600 = vrcp.pop %v599
    %v601 = vmul.f32 %v599, %v600
    %v602 = vsub.f32 1.0, %v601
    %v603 = vmul.f32 %v600, %v602
    %v604 = vadd.f32 %v600, %v603
    %vm605 = vweird.f32 %v599
    %vm606 = vweird.f32 %v600
    %vm607 = vmor %vm605, %vm606
    %v608 = vsel %vm607, %v600, %v604
    %v609 = vand.u32 2147483647, %v599
    %vm610 = vcmp.eq.f32.partialorder %v609, 8.507059e+37
    %v611 = vand.u32 %v599, 2147483648
    %v612 = vor.u32 1.1754944e-38, %v611
    %v613 = vsel %vm610, %v612, %v608
    %v614 = vmul.f32 1.0, %v613
    %v615 = vtanh.pop %v594
    %v616 = vmul.f32 %v614, %v564
    %618 = vrot.lane.b32.xlu0 %v615, 64
    %v619 = vpop.permute.xlu0 %618
    %v621 = vmul.f32 %v614, %v619
    %623 = vrot.lane.b32.xlu0 %v621, 32
    %v624 = vpop.permute.xlu0 %623
    %v626 = vadd.f32 %v616, %v624
    %v627 = vtanh.pop %v626
    %629 = vrot.lane.b32.xlu0 %v627, 64
    %v630 = vpop.permute.xlu0 %629
    %v632 = vmul.f32 %v614, %v630
    %634 = vrot.lane.b32.xlu0 %v632, 32
    %v635 = vpop.permute.xlu0 %634
    %v636 = vsel %vm317, %v635, 0
    %638 = vmatpush.msra.mxu0 0.0
    %639 = vmatpush.msra.mxu0 0.0
    %640 = vmatpush.msra.mxu0 0.0
    %641 = vmatpush.msra.mxu0 0.0
    %642 = vmatpush.msra.mxu0 0.0
    %643 = vmatpush.msra.mxu0 0.0
    %644 = vmatpush.msra.mxu0 0.0
    %645 = vmatpush.msra.mxu0 0.0
    %646 = vmatpush.msra.mxu0 0.0
    %647 = vmatpush.msra.mxu0 0.0
    %648 = vmatpush.msra.mxu0 0.0
    %649 = vmatpush.msra.mxu0 0.0
    %650 = vmatpush.msra.mxu0 %v386
    %651 = vmatpush.msra.mxu0 %v385
    %652 = vmatpush.msra.mxu0 %v384
    %653 = vmatpush.msra.mxu0 %v383
    %654 = vmatmul.f32.gmra.mxu0 %v636
    %v655 = vpop.f32.mrf.mxu0
    %v656 = vadd.f32 %v372, %v655
    %657 = vdwg.mxu0
    %v658 = vxor.u32 %v656, 2147483648
    %v659 = vmul.f32 %v658, 1.442695
    %v660 = vpow.pop %v659
    %v661 = vadd.f32 %v660, 1.0
    %v662 = vrcp.pop %v661
    %v663 = vmul.f32 %v661, %v662
    %v664 = vsub.f32 1.0, %v663
    %v665 = vmul.f32 %v662, %v664
    %v666 = vadd.f32 %v662, %v665
    %vm667 = vweird.f32 %v661
    %vm668 = vweird.f32 %v662
    %vm669 = vmor %vm667, %vm668
    %v670 = vsel %vm669, %v662, %v666
    %v671 = vand.u32 2147483647, %v661
    %vm672 = vcmp.eq.f32.partialorder %v671, 8.507059e+37
    %v673 = vand.u32 %v661, 2147483648
    %v674 = vor.u32 1.1754944e-38, %v673
    %v675 = vsel %vm672, %v674, %v670
    %v676 = vmul.f32 1.0, %v675
    %v677 = vtanh.pop %v656
    %v678 = vmul.f32 %v676, %v626
    %680 = vrot.lane.b32.xlu0 %v677, 64
    %v681 = vpop.permute.xlu0 %680
    %v683 = vmul.f32 %v676, %v681
    %685 = vrot.lane.b32.xlu0 %v683, 32
    %v686 = vpop.permute.xlu0 %685
    %v688 = vadd.f32 %v678, %v686
    %v689 = vtanh.pop %v688
    %691 = vrot.lane.b32.xlu0 %v689, 64
    %v692 = vpop.permute.xlu0 %691
    %v694 = vmul.f32 %v676, %v692
    %696 = vrot.lane.b32.xlu0 %v694, 32
    %v697 = vpop.permute.xlu0 %696
    %v698 = vsel %vm317, %v697, 0
    %700 = vmatpush.msra.mxu0 0.0
    %701 = vmatpush.msra.mxu0 0.0
    %702 = vmatpush.msra.mxu0 0.0
    %703 = vmatpush.msra.mxu0 0.0
    %704 = vmatpush.msra.mxu0 0.0
    %705 = vmatpush.msra.mxu0 0.0
    %706 = vmatpush.msra.mxu0 0.0
    %707 = vmatpush.msra.mxu0 0.0
    %708 = vmatpush.msra.mxu0 0.0
    %709 = vmatpush.msra.mxu0 0.0
    %710 = vmatpush.msra.mxu0 0.0
    %711 = vmatpush.msra.mxu0 0.0
    %712 = vmatpush.msra.mxu0 %v386
    %713 = vmatpush.msra.mxu0 %v385
    %714 = vmatpush.msra.mxu0 %v384
    %715 = vmatpush.msra.mxu0 %v383
    %716 = vmatmul.f32.gmra.mxu0 %v698
    %v717 = vpop.f32.mrf.mxu0
    %v718 = vadd.f32 %v375, %v717
    %719 = vdwg.mxu0
    %v720 = vxor.u32 %v718, 2147483648
    %v721 = vmul.f32 %v720, 1.442695
    %v722 = vpow.pop %v721
    %v723 = vadd.f32 %v722, 1.0
    %v724 = vrcp.pop %v723
    %v725 = vmul.f32 %v723, %v724
    %v726 = vsub.f32 1.0, %v725
    %v727 = vmul.f32 %v724, %v726
    %v728 = vadd.f32 %v724, %v727
    %vm729 = vweird.f32 %v723
    %vm730 = vweird.f32 %v724
    %vm731 = vmor %vm729, %vm730
    %v732 = vsel %vm731, %v724, %v728
    %v733 = vand.u32 2147483647, %v723
    %vm734 = vcmp.eq.f32.partialorder %v733, 8.507059e+37
    %v735 = vand.u32 %v723, 2147483648
    %v736 = vor.u32 1.1754944e-38, %v735
    %v737 = vsel %vm734, %v736, %v732
    %v738 = vmul.f32 1.0, %v737
    %v739 = vtanh.pop %v718
    %v740 = vmul.f32 %v738, %v688
    %742 = vrot.lane.b32.xlu0 %v739, 64
    %v743 = vpop.permute.xlu0 %742
    %v745 = vmul.f32 %v738, %v743
    %747 = vrot.lane.b32.xlu0 %v745, 32
    %v748 = vpop.permute.xlu0 %747
    %v750 = vadd.f32 %v740, %v748
    %v751 = vtanh.pop %v750
    %753 = vrot.lane.b32.xlu0 %v751, 64
    %v754 = vpop.permute.xlu0 %753
    %v756 = vmul.f32 %v738, %v754
    %758 = vrot.lane.b32.xlu0 %v756, 32
    %v759 = vpop.permute.xlu0 %758
    %v760 = vsel %vm317, %v759, 0
    %762 = vmatpush.msra.mxu0 0.0
    %763 = vmatpush.msra.mxu0 0.0
    %764 = vmatpush.msra.mxu0 0.0
    %765 = vmatpush.msra.mxu0 0.0
    %766 = vmatpush.msra.mxu0 0.0
    %767 = vmatpush.msra.mxu0 0.0
    %768 = vmatpush.msra.mxu0 0.0
    %769 = vmatpush.msra.mxu0 0.0
    %770 = vmatpush.msra.mxu0 0.0
    %771 = vmatpush.msra.mxu0 0.0
    %772 = vmatpush.msra.mxu0 0.0
    %773 = vmatpush.msra.mxu0 0.0
    %774 = vmatpush.msra.mxu0 %v386
    %775 = vmatpush.msra.mxu0 %v385
    %776 = vmatpush.msra.mxu0 %v384
    %777 = vmatpush.msra.mxu0 %v383
    %778 = vmatmul.f32.gmra.mxu0 %v760
    %v779 = vpop.f32.mrf.mxu0
    %v780 = vadd.f32 %v378, %v779
    %781 = vdwg.mxu0
    %v782 = vxor.u32 %v780, 2147483648
    %v783 = vmul.f32 %v782, 1.442695
    %v784 = vpow.pop %v783
    %v785 = vadd.f32 %v784, 1.0
    %v786 = vrcp.pop %v785
    %v787 = vmul.f32 %v785, %v786
    %v788 = vsub.f32 1.0, %v787
    %v789 = vmul.f32 %v786, %v788
    %v790 = vadd.f32 %v786, %v789
    %vm791 = vweird.f32 %v785
    %vm792 = vweird.f32 %v786
    %vm793 = vmor %vm791, %vm792
    %v794 = vsel %vm793, %v786, %v790
    %v795 = vand.u32 2147483647, %v785
    %vm796 = vcmp.eq.f32.partialorder %v795, 8.507059e+37
    %v797 = vand.u32 %v785, 2147483648
    %v798 = vor.u32 1.1754944e-38, %v797
    %v799 = vsel %vm796, %v798, %v794
    %v800 = vmul.f32 1.0, %v799
    %v801 = vtanh.pop %v780
    %v802 = vmul.f32 %v800, %v750
    %804 = vrot.lane.b32.xlu0 %v801, 64
    %v805 = vpop.permute.xlu0 %804
    %v807 = vmul.f32 %v800, %v805
    %809 = vrot.lane.b32.xlu0 %v807, 32
    %v810 = vpop.permute.xlu0 %809
    %v812 = vadd.f32 %v802, %v810
    %v813 = vtanh.pop %v812
    %815 = vrot.lane.b32.xlu0 %v813, 64
    %v816 = vpop.permute.xlu0 %815
    %v818 = vmul.f32 %v800, %v816
    %820 = vrot.lane.b32.xlu0 %v818, 32
    %v821 = vpop.permute.xlu0 %820
    %v822 = vsel %vm317, %v821, 0
    %824 = vmatpush.msra.mxu0 0.0
    %825 = vmatpush.msra.mxu0 0.0
    %826 = vmatpush.msra.mxu0 0.0
    %827 = vmatpush.msra.mxu0 0.0
    %828 = vmatpush.msra.mxu0 0.0
    %829 = vmatpush.msra.mxu0 0.0
    %830 = vmatpush.msra.mxu0 0.0
    %831 = vmatpush.msra.mxu0 0.0
    %832 = vmatpush.msra.mxu0 0.0
    %833 = vmatpush.msra.mxu0 0.0
    %834 = vmatpush.msra.mxu0 0.0
    %835 = vmatpush.msra.mxu0 0.0
    %836 = vmatpush.msra.mxu0 %v386
    %837 = vmatpush.msra.mxu0 %v385
    %838 = vmatpush.msra.mxu0 %v384
    %839 = vmatpush.msra.mxu0 %v383
    %840 = vmatmul.f32.gmra.mxu0 %v822
    %v841 = vpop.f32.mrf.mxu0
    %v842 = vadd.f32 %v381, %v841
    %843 = vdwg.mxu0
    %v844 = vxor.u32 %v842, 2147483648
    %v845 = vmul.f32 %v844, 1.442695
    %v846 = vpow.pop %v845
    %v847 = vadd.f32 %v846, 1.0
    %v848 = vrcp.pop %v847
    %v849 = vmul.f32 %v847, %v848
    %v850 = vsub.f32 1.0, %v849
    %v851 = vmul.f32 %v848, %v850
    %v852 = vadd.f32 %v848, %v851
    %vm853 = vweird.f32 %v847
    %vm854 = vweird.f32 %v848
    %vm855 = vmor %vm853, %vm854
    %v856 = vsel %vm855, %v848, %v852
    %v857 = vand.u32 2147483647, %v847
    %vm858 = vcmp.eq.f32.partialorder %v857, 8.507059e+37
    %v859 = vand.u32 %v847, 2147483648
    %v860 = vor.u32 1.1754944e-38, %v859
    %v861 = vsel %vm858, %v860, %v856
    %v862 = vmul.f32 1.0, %v861
    %v863 = vtanh.pop %v842
    %v864 = vmul.f32 %v862, %v812
    %866 = vrot.lane.b32.xlu0 %v863, 64
    %v867 = vpop.permute.xlu0 %866
    %v869 = vmul.f32 %v862, %v867
    %871 = vrot.lane.b32.xlu0 %v869, 32
    %v872 = vpop.permute.xlu0 %871
    %v874 = vadd.f32 %v864, %v872
    %v875 = vtanh.pop %v874
    %877 = vrot.lane.b32.xlu0 %v875, 64
    %v878 = vpop.permute.xlu0 %877
    %v880 = vmul.f32 %v862, %v878
    %v881 = vld [vmem:[%s8] sm:$0xff]
    %v882 = vld [vmem:[%s8 + $0x8] sm:$0xff]
    %v883 = vld [vmem:[%s8 + $0x10] sm:$0xff]
    %v884 = vld [vmem:[%s8 + $0x18] sm:$0xff]
    %v885 = vld [vmem:[%s8 + $0x20] sm:$0xff]
    %v886 = vld [vmem:[%s8 + $0x28] sm:$0xff]
    %v887 = vld [vmem:[%s8 + $0x30] sm:$0xff]
    %v888 = vld [vmem:[%s8 + $0x38] sm:$0xff]
    %v889 = vld [vmem:[%s8 + $0x40] sm:$0xff]
    %v890 = vld [vmem:[%s8 + $0x48] sm:$0xff]
    %v891 = vld [vmem:[%s8 + $0x50] sm:$0xff]
    %v892 = vld [vmem:[%s8 + $0x58] sm:$0xff]
    %v893 = vld [vmem:[%s9] sm:$0x7]
    %v895 = vperm.slane %v893, 0
    %v896 = vperm.slane %v893, 1
    %v897 = vperm.slane %v893, 2
    %902 = vrot.lane.b32.xlu0 %v880, 32
    %v903 = vpop.permute.xlu0 %902
    %v904 = vsel %vm317, %v903, 0
    %906 = vmatpush.msra.mxu0 0.0
    %907 = vmatpush.msra.mxu0 0.0
    %908 = vmatpush.msra.mxu0 0.0
    %909 = vmatpush.msra.mxu0 0.0
    %910 = vmatpush.msra.mxu0 0.0
    %911 = vmatpush.msra.mxu0 0.0
    %912 = vmatpush.msra.mxu0 0.0
    %913 = vmatpush.msra.mxu0 0.0
    %914 = vmatpush.msra.mxu0 0.0
    %915 = vmatpush.msra.mxu0 0.0
    %916 = vmatpush.msra.mxu0 0.0
    %917 = vmatpush.msra.mxu0 0.0
    %918 = vmatpush.msra.mxu0 %v890
    %919 = vmatpush.msra.mxu0 %v887
    %920 = vmatpush.msra.mxu0 %v884
    %921 = vmatpush.msra.mxu0 %v881
    %922 = vmatmul.f32.gmra.mxu0 %v904
    %v923 = vpop.f32.mrf.mxu0
    %v924 = vadd.f32 %v895, %v923
    %925 = vdwg.mxu0
    %926 = vmatpush.msra.mxu0 0.0
    %927 = vmatpush.msra.mxu0 0.0
    %928 = vmatpush.msra.mxu0 0.0
    %929 = vmatpush.msra.mxu0 0.0
    %930 = vmatpush.msra.mxu0 0.0
    %931 = vmatpush.msra.mxu0 0.0
    %932 = vmatpush.msra.mxu0 0.0
    %933 = vmatpush.msra.mxu0 0.0
    %934 = vmatpush.msra.mxu0 0.0
    %935 = vmatpush.msra.mxu0 0.0
    %936 = vmatpush.msra.mxu0 0.0
    %937 = vmatpush.msra.mxu0 0.0
    %938 = vmatpush.msra.mxu0 %v891
    %939 = vmatpush.msra.mxu0 %v888
    %940 = vmatpush.msra.mxu0 %v885
    %941 = vmatpush.msra.mxu0 %v882
    %942 = vmatmul.f32.gmra.mxu0 %v904
    %v943 = vpop.f32.mrf.mxu0
    %v944 = vadd.f32 %v896, %v943
    %945 = vdwg.mxu0
    %946 = vmatpush.msra.mxu0 0.0
    %947 = vmatpush.msra.mxu0 0.0
    %948 = vmatpush.msra.mxu0 0.0
    %949 = vmatpush.msra.mxu0 0.0
    %950 = vmatpush.msra.mxu0 0.0
    %951 = vmatpush.msra.mxu0 0.0
    %952 = vmatpush.msra.mxu0 0.0
    %953 = vmatpush.msra.mxu0 0.0
    %954 = vmatpush.msra.mxu0 0.0
    %955 = vmatpush.msra.mxu0 0.0
    %956 = vmatpush.msra.mxu0 0.0
    %957 = vmatpush.msra.mxu0 0.0
    %958 = vmatpush.msra.mxu0 %v892
    %959 = vmatpush.msra.mxu0 %v889
    %960 = vmatpush.msra.mxu0 %v886
    %961 = vmatpush.msra.mxu0 %v883
    %962 = vmatmul.f32.gmra.mxu0 %v904
    %v963 = vpop.f32.mrf.mxu0
    %v964 = vadd.f32 %v897, %v963
    %965 = vdwg.mxu0
    %v966 = vmax.f32 %v924, 0.0
    %v967 = vmax.f32 %v944, 0.0
    %v968 = vmax.f32 %v964, 0.0
    %v969 = vld [vmem:[%s10] sm:$0xff]
    %v970 = vld [vmem:[%s10 + $0x8] sm:$0xff]
    %v971 = vld [vmem:[%s10 + $0x10] sm:$0xff]
    %v972 = vld [vmem:[%s10 + $0x18] sm:$0xff]
    %v973 = vld [vmem:[%s10 + $0x20] sm:$0xff]
    %v974 = vld [vmem:[%s10 + $0x28] sm:$0xff]
    %v975 = vld [vmem:[%s10 + $0x30] sm:$0xff]
    %v976 = vld [vmem:[%s10 + $0x38] sm:$0xff]
    %v977 = vld [vmem:[%s10 + $0x40] sm:$0xff]
    %v978 = vld [vmem:[%s10 + $0x48] sm:$0xff]
    %v979 = vld [vmem:[%s10 + $0x50] sm:$0xff]
    %v980 = vld [vmem:[%s10 + $0x58] sm:$0xff]
    %v981 = vld [vmem:[%s10 + $0x60] sm:$0xff]
    %v982 = vld [vmem:[%s10 + $0x68] sm:$0xff]
    %v983 = vld [vmem:[%s10 + $0x70] sm:$0xff]
    %v984 = vld [vmem:[%s10 + $0x78] sm:$0xff]
    %v985 = vld [vmem:[%s10 + $0x80] sm:$0xff]
    %v986 = vld [vmem:[%s10 + $0x88] sm:$0xff]
    %v987 = vld [vmem:[%s10 + $0x90] sm:$0xff]
    %v988 = vld [vmem:[%s10 + $0x98] sm:$0xff]
    %v989 = vld [vmem:[%s10 + $0xa0] sm:$0xff]
    %v990 = vld [vmem:[%s10 + $0xa8] sm:$0xff]
    %v991 = vld [vmem:[%s10 + $0xb0] sm:$0xff]
    %v992 = vld [vmem:[%s10 + $0xb8] sm:$0xff]
    %v993 = vld [vmem:[%s10 + $0xc0] sm:$0xff]
    %v994 = vld [vmem:[%s10 + $0xc8] sm:$0xff]
    %v995 = vld [vmem:[%s10 + $0xd0] sm:$0xff]
    %v996 = vld [vmem:[%s10 + $0xd8] sm:$0xff]
    %v997 = vld [vmem:[%s10 + $0xe0] sm:$0xff]
    %v998 = vld [vmem:[%s10 + $0xe8] sm:$0xff]
    %v999 = vld [vmem:[%s10 + $0xf0] sm:$0xff]
    %v1000 = vld [vmem:[%s10 + $0xf8] sm:$0xff]
    %v1001 = vld [vmem:[%s10 + $0x100] sm:$0xff]
    %v1002 = vld [vmem:[%s10 + $0x108] sm:$0xff]
    %v1003 = vld [vmem:[%s10 + $0x110] sm:$0xff]
    %v1004 = vld [vmem:[%s10 + $0x118] sm:$0xff]
    %v1005 = vld [vmem:[%s10 + $0x120] sm:$0xff]
    %v1006 = vld [vmem:[%s10 + $0x128] sm:$0xff]
    %v1007 = vld [vmem:[%s10 + $0x130] sm:$0xff]
    %v1008 = vld [vmem:[%s10 + $0x138] sm:$0xff]
    %v1009 = vld [vmem:[%s10 + $0x140] sm:$0xff]
    %v1010 = vld [vmem:[%s10 + $0x148] sm:$0xff]
    %v1011 = vld [vmem:[%s10 + $0x150] sm:$0xff]
    %v1012 = vld [vmem:[%s10 + $0x158] sm:$0xff]
    %v1013 = vld [vmem:[%s10 + $0x160] sm:$0xff]
    %v1014 = vld [vmem:[%s10 + $0x168] sm:$0xff]
    %v1015 = vld [vmem:[%s10 + $0x170] sm:$0xff]
    %v1016 = vld [vmem:[%s10 + $0x178] sm:$0xff]
    %v1017 = vld [vmem:[%s11] sm:$0x1]
    %v1019 = vperm.slane %v1017, 0
    %1021 = vmatpush.msra.mxu0 %v984
    %1022 = vmatpush.msra.mxu0 %v983
    %1023 = vmatpush.msra.mxu0 %v982
    %1024 = vmatpush.msra.mxu0 %v981
    %1025 = vmatpush.msra.mxu0 %v980
    %1026 = vmatpush.msra.mxu0 %v979
    %1027 = vmatpush.msra.mxu0 %v978
    %1028 = vmatpush.msra.mxu0 %v977
    %1029 = vmatpush.msra.mxu0 %v976
    %1030 = vmatpush.msra.mxu0 %v975
    %1031 = vmatpush.msra.mxu0 %v974
    %1032 = vmatpush.msra.mxu0 %v973
    %1033 = vmatpush.msra.mxu0 %v972
    %1034 = vmatpush.msra.mxu0 %v971
    %1035 = vmatpush.msra.mxu0 %v970
    %1036 = vmatpush.msra.mxu0 %v969
    %1037 = vmatmul.f32.gmra.mxu0 %v966
    %v1038 = vpop.f32.mrf.mxu0
    %v1039 = vadd.f32 %v1019, %v1038
    %1040 = vdwg.mxu0
    %1041 = vmatpush.msra.mxu0 %v1000
    %1042 = vmatpush.msra.mxu0 %v999
    %1043 = vmatpush.msra.mxu0 %v998
    %1044 = vmatpush.msra.mxu0 %v997
    %1045 = vmatpush.msra.mxu0 %v996
    %1046 = vmatpush.msra.mxu0 %v995
    %1047 = vmatpush.msra.mxu0 %v994
    %1048 = vmatpush.msra.mxu0 %v993
    %1049 = vmatpush.msra.mxu0 %v992
    %1050 = vmatpush.msra.mxu0 %v991
    %1051 = vmatpush.msra.mxu0 %v990
    %1052 = vmatpush.msra.mxu0 %v989
    %1053 = vmatpush.msra.mxu0 %v988
    %1054 = vmatpush.msra.mxu0 %v987
    %1055 = vmatpush.msra.mxu0 %v986
    %1056 = vmatpush.msra.mxu0 %v985
    %1057 = vmatmul.f32.gmra.mxu0 %v967
    %v1058 = vpop.f32.mrf.mxu0
    %v1059 = vadd.f32 %v1039, %v1058
    %1060 = vdwg.mxu0
    %1061 = vmatpush.msra.mxu0 %v1016
    %1062 = vmatpush.msra.mxu0 %v1015
    %1063 = vmatpush.msra.mxu0 %v1014
    %1064 = vmatpush.msra.mxu0 %v1013
    %1065 = vmatpush.msra.mxu0 %v1012
    %1066 = vmatpush.msra.mxu0 %v1011
    %1067 = vmatpush.msra.mxu0 %v1010
    %1068 = vmatpush.msra.mxu0 %v1009
    %1069 = vmatpush.msra.mxu0 %v1008
    %1070 = vmatpush.msra.mxu0 %v1007
    %1071 = vmatpush.msra.mxu0 %v1006
    %1072 = vmatpush.msra.mxu0 %v1005
    %1073 = vmatpush.msra.mxu0 %v1004
    %1074 = vmatpush.msra.mxu0 %v1003
    %1075 = vmatpush.msra.mxu0 %v1002
    %1076 = vmatpush.msra.mxu0 %v1001
    %1077 = vmatmul.f32.gmra.mxu0 %v968
    %v1078 = vpop.f32.mrf.mxu0
    %v1079 = vadd.f32 %v1059, %v1078
    %1080 = vdwg.mxu0
    %v1081 = vlaneseq
    %v1082 = vand.u32 %v1081, 127
    %vm1083 = vcmp.ge.s32.totalorder %v1082, 4
    %vm1084 = vcmp.lt.s32.totalorder %v1082, 8
    %vm1085 = vmand %vm1083, %vm1084
    %vm1086 = vcmp.gt.f32.partialorder %v1079, 20.0
    %v1087 = vmin.f32 %v1079, 20.0
    %v1088 = vmul.f32 %v1087, 1.442695
    %v1089 = vpow.pop %v1088
    %v1090 = vadd.f32 %v1089, 1.0
    %v1091 = vlog2.pop %v1090
    %v1092 = vmul.f32 %v1091, 0.6931472
    %v1093 = vmul.f32 -0.5, %v1089
    %v1094 = vadd.f32 %v1093, 1.0
    %v1095 = vmul.f32 %v1094, %v1089
    %v1096 = vand.u32 2147483647, %v1089
    %vm1097 = vcmp.lt.f32.partialorder %v1096, 0.0004427343
    %v1098 = vsel %vm1097, %v1095, %v1092
    %v1099 = vsel %vm1086, %v1079, %v1098
    %v1100 = vadd.f32 %v1099, 1e-06
    %v1101 = vsel %vm1085, %v1100, %v1079
    %1102 = vrot.lane.b32.xlu0 %v880, 41
    %v1103 = vpop.permute.xlu0 %1102
    %1106 = vrot.lane.b32.xlu0 %v874, 9
    %v1107 = vpop.permute.xlu0 %1106
    %vm1109 = vcmask 72704
    %v1110 = vsel %vm1109, %v1101, %v1103
    %vm1111 = vcmask 334848
    %v1112 = vsel %vm1111, %v1110, %v1107
    %vm1113 = vcmask 596992
    %v1114 = vsel %vm1113, %v1112, 0.0
    %1115 = vst [vmem:[#allocation2] sm:$0xff] %v1114
    // Predicated region
    $region50: #{tpu_custom_call.1} parent=1 // pred_check
      _
    $region51: #{tpu_custom_call.1} parent=1 // pred_check_branch
      %1117 = sbr.rel (0) target = $region53
    $region52: #{tpu_custom_call.1} parent=1 // pred_region
      %1119 = vsyncadd [#allocation3], 0
      %s1121 = sshll.u32 [#allocation2], 4
      %s1122 = int_to_ptr.vmem [resolvable:$true] %s1121
      %s1123 = sshll.u32 %s12, 4
      %s1124 = int_to_ptr.hbm [resolvable:$true] %s1123
      %1126 = dma.vmem_to_hbm [thread:$0]  %s1122, 128, %s1124, [#allocation3]
    $region53: #{tpu_custom_call.1} parent=1 // pred_fallthru
      _
    // Predicated region
    $region54: #{tpu_custom_call.1} parent=1 // pred_check
      _
    $region55: #{tpu_custom_call.1} parent=1 // pred_check_branch
      %1128 = sbr.rel (0) target = $region57
    $region56: #{tpu_custom_call.1} parent=1 // pred_region
      %1130 = dma.done [#allocation3], 128
    $region57: #{tpu_custom_call.1} parent=1 // pred_fallthru
      _
    %1131 = vsyncpa [#allocation3], 1

</llo_original>
